<compile_context>
chip_gen: v6e
topology: v6e:2x2x1
jax: 0.10.0
libtpu: 0.0.40
codegen_flags: <defaults>
</compile_context>

<pallas_src>
import jax
import jax.numpy as jnp
from jax.experimental import pallas as pl
from jax.experimental.pallas import tpu as pltpu


def _round_up(x, m):
    return ((x + m - 1) // m) * m


# ---------------------------------------------------------------------------
# Fused Pallas kernel: all GIN layers + JK + mean-pool + MLP head (one call)
# ---------------------------------------------------------------------------

def fused_gin_kernel(a_ref, x0_ref, w1_ref, w2_ref, bn_ref, l1w_ref,
                     pool_ref, invc_ref, l1b_ref, l2w_ref, l2b_ref, out_ref):
    num_layers = w1_ref.shape[0]
    graphs_p = pool_ref.shape[0]
    hidden_p = w1_ref.shape[2]

    x = x0_ref[...]                                          # (Np, Hp) bf16
    head_acc = jnp.zeros((graphs_p, hidden_p), jnp.float32)  # JK + lin1 acc

    # Fully unrolled layer loop (L is static and small): no pipeline-step
    # boundaries, all weights resident, one visible schedule for the LLO.
    for l in range(num_layers):
        # GIN aggregation (1+eps)*x_i + sum_{j in N(i)} x_j  ==  A_hat @ X
        agg = jnp.dot(a_ref[...], x, preferred_element_type=jnp.float32)

        bn = bn_ref[l]          # (8, Hp) f32 rows: b1, b2, BN scale, BN shift
        # MLP: Linear -> ReLU -> Linear -> ReLU  (bf16 MXU, f32 accumulate)
        h = jnp.dot(agg.astype(jnp.bfloat16), w1_ref[l],
                    preferred_element_type=jnp.float32) + bn[0:1]
        h = jnp.maximum(h, 0.0)
        h = jnp.dot(h.astype(jnp.bfloat16), w2_ref[l],
                    preferred_element_type=jnp.float32) + bn[1:2]
        h = jnp.maximum(h, 0.0)
        # BatchNorm1d (eval) folded into scale/shift.
        h = h * bn[2:3] + bn[3:4]

        # Single bf16 cast, reused for the carry AND the pooling matmul.
        x = h.astype(jnp.bfloat16)

        # Exact 0/1 one-hot sum-pool (bf16 MXU, f32 acc); the per-graph
        # 1/count mean rescale is applied once at finalize (it commutes with
        # the @ lin1 right-multiply).
        pooled = jnp.dot(pool_ref[...], x, preferred_element_type=jnp.float32)

        # JK concat + lin1 decomposed per layer:
        #   lin1(concat_l mean_pool(x_l)) == sum_l mean_pool(x_l) @ W1_l
        head_acc = head_acc + jnp.dot(pooled.astype(jnp.bfloat16), l1w_ref[l],
                                      preferred_element_type=jnp.float32)

    # Head: mean rescale + lin1 bias + ReLU; dropout is identity in eval.
    hh = jnp.maximum(invc_ref[...] * head_acc + l1b_ref[...], 0.0)
    # lin2 (output width 1): lane reduction instead of a width-1 MXU matmul.
    out_ref[...] = (jnp.sum(hh * l2w_ref[...], axis=-1, keepdims=True)
                    + l2b_ref[...])


def gin_fused(a_hat, x0, w1s, w2s, bn_pack, l1ws, pool_onehot, inv_counts,
              l1b, l2w_row, l2b):
    operands = (a_hat, x0, w1s, w2s, bn_pack, l1ws, pool_onehot, inv_counts,
                l1b, l2w_row, l2b)
    graphs_p = pool_onehot.shape[0]

    # VMEM budget from actual operand sizes + headroom for f32 intermediates.
    # Capped at 48 MiB so the same budget is safe on v7x (64 MiB physical);
    # on v5e/v6e this may be raised toward ~96-112 MiB before tiling.
    op_bytes = sum(int(o.size) * o.dtype.itemsize for o in operands)
    vmem_limit = min(max(2 * op_bytes + (4 << 20), 16 << 20), 48 << 20)

    return pl.pallas_call(
        fused_gin_kernel,
        out_shape=jax.ShapeDtypeStruct((graphs_p, 1), jnp.float32),
        compiler_params=pltpu.CompilerParams(vmem_limit_bytes=vmem_limit),
    )(*operands)


# ---------------------------------------------------------------------------
# Parameter init (deterministic, mirrors shapes in GIN.__init__)
# ---------------------------------------------------------------------------

def _linear_init(key, fan_in, fan_out):
    kw, kb = jax.random.split(key)
    bound = 1.0 / jnp.sqrt(fan_in)
    w = jax.random.uniform(kw, (fan_in, fan_out), jnp.float32, -bound, bound)
    b = jax.random.uniform(kb, (fan_out,), jnp.float32, -bound, bound)
    return w, b


def init_params(key, hidden, num_layers, max_z):
    keys = jax.random.split(key, 1 + 2 * num_layers + 2)
    params = {}
    # Embedding(max_z, hidden) ~ N(0, 1)
    params["z_emb"] = jax.random.normal(keys[0], (max_z, hidden), jnp.float32)
    layers = []
    for l in range(num_layers):
        in_ch = hidden  # use_feature=False, node_embedding=None
        w1, b1 = _linear_init(keys[1 + 2 * l], in_ch, hidden)
        w2, b2 = _linear_init(keys[2 + 2 * l], hidden, hidden)
        layers.append(dict(
            w1=w1, b1=b1, w2=w2, b2=b2,
            gamma=jnp.ones((hidden,), jnp.float32),
            beta=jnp.zeros((hidden,), jnp.float32),
            running_mean=jnp.zeros((hidden,), jnp.float32),
            running_var=jnp.ones((hidden,), jnp.float32),
        ))
    params["layers"] = layers
    # jk=True -> lin1: Linear(num_layers*hidden, hidden)
    params["lin1_w"], params["lin1_b"] = _linear_init(keys[-2], num_layers * hidden, hidden)
    params["lin2_w"], params["lin2_b"] = _linear_init(keys[-1], hidden, 1)
    return params


# ---------------------------------------------------------------------------
# Forward: JAX glue builds padded operands, single fused Pallas call
# ---------------------------------------------------------------------------

def gin_forward(params, z, edge_index, batch, num_graphs, eps=0.0):
    N = z.shape[0]
    H = params["z_emb"].shape[1]
    L = len(params["layers"])
    Np = _round_up(N, 128)          # lane-dense neighbor/node axis
    Hp = _round_up(H, 128)          # lane-dense channel axis
    Gp = _round_up(num_graphs, 8)   # sublane-aligned graph axis

    # z_embedding lookup (z is 1-D -> no sum-over-dim-1 branch), pad, bf16.
    # TODO(synk): embedding gather + dense A_hat/one-hot construction stay in
    # XLA preprocessing; no dense-Pallas win at these sizes.
    x0 = jnp.take(params["z_emb"], z, axis=0)                     # [N, H]
    x0 = jnp.pad(x0, ((0, Np - N), (0, Hp - H))).astype(jnp.bfloat16)

    # Dense aggregation operator with self-loops folded into the scatter:
    # A_hat[i, j] = #edges j->i, plus (1+eps) on the diagonal.  Edge counts
    # and (1+eps) are small integers -> exact in bf16.  Padded rows/COLUMNS
    # stay zero so padded nodes never leak into real ones.
    src, dst = edge_index[0], edge_index[1]
    E = src.shape[0]
    loop = jnp.arange(N, dtype=src.dtype)
    all_dst = jnp.concatenate([dst, loop])
    all_src = jnp.concatenate([src, loop])
    vals = jnp.concatenate([jnp.ones((E,), jnp.float32),
                            jnp.full((N,), 1.0 + eps, jnp.float32)])
    a_hat = jnp.zeros((Np, Np), jnp.float32).at[all_dst, all_src].add(vals)
    a_hat = a_hat.astype(jnp.bfloat16)

    def pad_mat(w):
        return jnp.pad(w, ((0, Hp - w.shape[0]), (0, Hp - w.shape[1])))

    def pad_vec(v):
        return jnp.pad(v, (0, Hp - v.shape[0]))

    w1s, w2s, l1ws, bns = [], [], [], []
    lin1_w = params["lin1_w"]
    for l, layer in enumerate(params["layers"]):
        w1s.append(pad_mat(layer["w1"]).astype(jnp.bfloat16))
        w2s.append(pad_mat(layer["w2"]).astype(jnp.bfloat16))
        scale = layer["gamma"] / jnp.sqrt(layer["running_var"] + 1e-5)
        shift = layer["beta"] - layer["running_mean"] * scale
        # Pack b1 / b2 / BN-scale / BN-shift into one [8, Hp] f32 block.
        bn_rows = jnp.stack([pad_vec(layer["b1"]), pad_vec(layer["b2"]),
                             pad_vec(scale), pad_vec(shift)], axis=0)
        bns.append(jnp.pad(bn_rows, ((0, 4), (0, 0))))               # [8, Hp]
        l1ws.append(pad_mat(lin1_w[l * H:(l + 1) * H, :]).astype(jnp.bfloat16))

    w1s = jnp.stack(w1s)                   # [L, Hp, Hp] bf16
    w2s = jnp.stack(w2s)                   # [L, Hp, Hp] bf16
    l1ws = jnp.stack(l1ws)                 # [L, Hp, Hp] bf16
    bn_pack = jnp.stack(bns)               # [L, 8, Hp]  f32

    # Exact 0/1 one-hot sum-pool matrix (bf16) + per-graph f32 1/count.
    one_hot = (batch[None, :] == jnp.arange(num_graphs)[:, None])   # [G, N]
    counts = one_hot.sum(axis=1, keepdims=True).astype(jnp.float32)
    inv_counts = 1.0 / jnp.maximum(counts, 1.0)                      # [G, 1]
    pool_onehot = jnp.pad(one_hot.astype(jnp.bfloat16),
                          ((0, Gp - num_graphs), (0, Np - N)))       # [Gp, Np]
    inv_counts = jnp.pad(inv_counts, ((0, Gp - num_graphs), (0, 0)))  # [Gp, 1]

    l1b = jnp.pad(params["lin1_b"], (0, Hp - H))[None, :]             # [1, Hp]
    l2w_row = jnp.pad(params["lin2_w"][:, 0], (0, Hp - H))[None, :]   # [1, Hp]
    l2b = params["lin2_b"][None, :]                                    # [1, 1]

    out = gin_fused(a_hat, x0, w1s, w2s, bn_pack, l1ws, pool_onehot,
                    inv_counts, l1b, l2w_row, l2b)
    return out[:num_graphs]


# ---------------------------------------------------------------------------
# Demo
# ---------------------------------------------------------------------------

if __name__ == "__main__":
    N, HIDDEN, NUM_LAYERS, MAX_Z, NUM_GRAPHS = 64, 32, 3, 10, 2

    root = jax.random.PRNGKey(0)
    k_params, k_z, k_edges = jax.random.split(root, 3)

    params = init_params(k_params, HIDDEN, NUM_LAYERS, MAX_Z)

    # Node labels (DRNL-style z), small synthetic graph, batch assignment.
    z = jax.random.randint(k_z, (N,), 0, MAX_Z, dtype=jnp.int32)

    # Ring edges (both directions) plus some random symmetric edges.
    idx = jnp.arange(N, dtype=jnp.int32)
    ring_src = jnp.concatenate([idx, (idx + 1) % N])
    ring_dst = jnp.concatenate([(idx + 1) % N, idx])
    rnd = jax.random.randint(k_edges, (2, 32), 0, N, dtype=jnp.int32)
    src = jnp.concatenate([ring_src, rnd[0], rnd[1]])
    dst = jnp.concatenate([ring_dst, rnd[1], rnd[0]])
    edge_index = jnp.stack([src, dst], axis=0)  # [2, E]

    batch = jnp.concatenate([
        jnp.zeros((N // 2,), jnp.int32),
        jnp.ones((N - N // 2,), jnp.int32),
    ])

    out = gin_forward(params, z, edge_index, batch, NUM_GRAPHS)
    out = jax.block_until_ready(out)
    assert out.shape == (NUM_GRAPHS, 1), out.shape
    assert jnp.all(jnp.isfinite(out))
    print("KERNEL_OK")
</pallas_src>

<mosaic_0001>
module attributes {stable_mosaic.version = 11 : i64} {
  func.func @fused_gin_kernel(%arg0: memref<128x128xbf16, #tpu.memory_space<vmem>>, %arg1: memref<128x128xbf16, #tpu.memory_space<vmem>>, %arg2: memref<3x128x128xbf16, #tpu.memory_space<vmem>>, %arg3: memref<3x128x128xbf16, #tpu.memory_space<vmem>>, %arg4: memref<3x8x128xf32, #tpu.memory_space<vmem>>, %arg5: memref<3x128x128xbf16, #tpu.memory_space<vmem>>, %arg6: memref<8x128xbf16, #tpu.memory_space<vmem>>, %arg7: memref<8x1xf32, #tpu.memory_space<vmem>>, %arg8: memref<1x128xf32, #tpu.memory_space<vmem>>, %arg9: memref<1x128xf32, #tpu.memory_space<vmem>>, %arg10: memref<1x1xf32, #tpu.memory_space<vmem>>, %arg11: memref<8x1xf32, #tpu.memory_space<vmem>>) attributes {dimension_semantics = [], scalar_prefetch = 0 : i64, scratch_operands = 0 : i64, tpu.core_type = #tpu.core_type<tc>} {
    %c0 = arith.constant 0 : index
    %c0_0 = arith.constant 0 : index
    %0 = vector.load %arg1[%c0, %c0_0] : memref<128x128xbf16, #tpu.memory_space<vmem>>, vector<128x128xbf16>
    %cst = arith.constant 0.000000e+00 : f32
    %1 = vector.broadcast %cst : f32 to vector<8x128xf32>
    %c0_1 = arith.constant 0 : index
    %c0_2 = arith.constant 0 : index
    %2 = vector.load %arg0[%c0_1, %c0_2] : memref<128x128xbf16, #tpu.memory_space<vmem>>, vector<128x128xbf16>
    %cst_3 = arith.constant dense<0.000000e+00> : vector<128x128xf32>
    %3 = tpu.matmul %2, %0, %cst_3 {dimension_numbers = #tpu.dot_dimension_numbers<[1], [0], [0], [1], [0, 0, 1, 1], [], []>} : vector<128x128xbf16>, vector<128x128xbf16>, vector<128x128xf32> -> vector<128x128xf32>
    %c0_4 = arith.constant 0 : index
    %c0_5 = arith.constant 0 : index
    %c0_6 = arith.constant 0 : index
    %4 = vector.load %arg4[%c0_4, %c0_5, %c0_6] : memref<3x8x128xf32, #tpu.memory_space<vmem>>, vector<1x8x128xf32>
    %5 = vector.shape_cast %4 : vector<1x8x128xf32> to vector<8x128xf32>
    %6 = arith.truncf %3 : vector<128x128xf32> to vector<128x128xbf16>
    %c0_7 = arith.constant 0 : index
    %c0_8 = arith.constant 0 : index
    %c0_9 = arith.constant 0 : index
    %7 = vector.load %arg2[%c0_7, %c0_8, %c0_9] : memref<3x128x128xbf16, #tpu.memory_space<vmem>>, vector<1x128x128xbf16>
    %8 = vector.shape_cast %7 : vector<1x128x128xbf16> to vector<128x128xbf16>
    %cst_10 = arith.constant dense<0.000000e+00> : vector<128x128xf32>
    %9 = tpu.matmul %6, %8, %cst_10 {dimension_numbers = #tpu.dot_dimension_numbers<[1], [0], [0], [1], [0, 0, 1, 1], [], []>} : vector<128x128xbf16>, vector<128x128xbf16>, vector<128x128xf32> -> vector<128x128xf32>
    %10 = vector.extract_strided_slice %5 {offsets = [0, 0], sizes = [1, 128], strides = [1, 1]} : vector<8x128xf32> to vector<1x128xf32>
    %11 = vector.broadcast %10 : vector<1x128xf32> to vector<128x128xf32>
    %12 = arith.addf %9, %11 : vector<128x128xf32>
    %cst_11 = arith.constant 0.000000e+00 : f32
    %13 = vector.broadcast %cst_11 : f32 to vector<128x128xf32>
    %14 = arith.maximumf %12, %13 : vector<128x128xf32>
    %15 = arith.truncf %14 : vector<128x128xf32> to vector<128x128xbf16>
    %c0_12 = arith.constant 0 : index
    %c0_13 = arith.constant 0 : index
    %c0_14 = arith.constant 0 : index
    %16 = vector.load %arg3[%c0_12, %c0_13, %c0_14] : memref<3x128x128xbf16, #tpu.memory_space<vmem>>, vector<1x128x128xbf16>
    %17 = vector.shape_cast %16 : vector<1x128x128xbf16> to vector<128x128xbf16>
    %cst_15 = arith.constant dense<0.000000e+00> : vector<128x128xf32>
    %18 = tpu.matmul %15, %17, %cst_15 {dimension_numbers = #tpu.dot_dimension_numbers<[1], [0], [0], [1], [0, 0, 1, 1], [], []>} : vector<128x128xbf16>, vector<128x128xbf16>, vector<128x128xf32> -> vector<128x128xf32>
    %19 = vector.extract_strided_slice %5 {offsets = [1, 0], sizes = [1, 128], strides = [1, 1]} : vector<8x128xf32> to vector<1x128xf32>
    %20 = vector.broadcast %19 : vector<1x128xf32> to vector<128x128xf32>
    %21 = arith.addf %18, %20 : vector<128x128xf32>
    %cst_16 = arith.constant 0.000000e+00 : f32
    %22 = vector.broadcast %cst_16 : f32 to vector<128x128xf32>
    %23 = arith.maximumf %21, %22 : vector<128x128xf32>
    %24 = vector.extract_strided_slice %5 {offsets = [2, 0], sizes = [1, 128], strides = [1, 1]} : vector<8x128xf32> to vector<1x128xf32>
    %25 = vector.broadcast %24 : vector<1x128xf32> to vector<128x128xf32>
    %26 = arith.mulf %23, %25 : vector<128x128xf32>
    %27 = vector.extract_strided_slice %5 {offsets = [3, 0], sizes = [1, 128], strides = [1, 1]} : vector<8x128xf32> to vector<1x128xf32>
    %28 = vector.broadcast %27 : vector<1x128xf32> to vector<128x128xf32>
    %29 = arith.addf %26, %28 : vector<128x128xf32>
    %30 = arith.truncf %29 : vector<128x128xf32> to vector<128x128xbf16>
    %c0_17 = arith.constant 0 : index
    %c0_18 = arith.constant 0 : index
    %31 = vector.load %arg6[%c0_17, %c0_18] : memref<8x128xbf16, #tpu.memory_space<vmem>>, vector<8x128xbf16>
    %cst_19 = arith.constant dense<0.000000e+00> : vector<8x128xf32>
    %32 = tpu.matmul %31, %30, %cst_19 {dimension_numbers = #tpu.dot_dimension_numbers<[1], [0], [0], [1], [0, 0, 1, 1], [], []>} : vector<8x128xbf16>, vector<128x128xbf16>, vector<8x128xf32> -> vector<8x128xf32>
    %33 = arith.truncf %32 : vector<8x128xf32> to vector<8x128xbf16>
    %c0_20 = arith.constant 0 : index
    %c0_21 = arith.constant 0 : index
    %c0_22 = arith.constant 0 : index
    %34 = vector.load %arg5[%c0_20, %c0_21, %c0_22] : memref<3x128x128xbf16, #tpu.memory_space<vmem>>, vector<1x128x128xbf16>
    %35 = vector.shape_cast %34 : vector<1x128x128xbf16> to vector<128x128xbf16>
    %cst_23 = arith.constant dense<0.000000e+00> : vector<8x128xf32>
    %36 = tpu.matmul %33, %35, %cst_23 {dimension_numbers = #tpu.dot_dimension_numbers<[1], [0], [0], [1], [0, 0, 1, 1], [], []>} : vector<8x128xbf16>, vector<128x128xbf16>, vector<8x128xf32> -> vector<8x128xf32>
    %37 = arith.addf %1, %36 : vector<8x128xf32>
    %c0_24 = arith.constant 0 : index
    %c0_25 = arith.constant 0 : index
    %38 = vector.load %arg0[%c0_24, %c0_25] : memref<128x128xbf16, #tpu.memory_space<vmem>>, vector<128x128xbf16>
    %cst_26 = arith.constant dense<0.000000e+00> : vector<128x128xf32>
    %39 = tpu.matmul %38, %30, %cst_26 {dimension_numbers = #tpu.dot_dimension_numbers<[1], [0], [0], [1], [0, 0, 1, 1], [], []>} : vector<128x128xbf16>, vector<128x128xbf16>, vector<128x128xf32> -> vector<128x128xf32>
    %c1 = arith.constant 1 : index
    %c0_27 = arith.constant 0 : index
    %c0_28 = arith.constant 0 : index
    %40 = vector.load %arg4[%c1, %c0_27, %c0_28] : memref<3x8x128xf32, #tpu.memory_space<vmem>>, vector<1x8x128xf32>
    %41 = vector.shape_cast %40 : vector<1x8x128xf32> to vector<8x128xf32>
    %42 = arith.truncf %39 : vector<128x128xf32> to vector<128x128xbf16>
    %c1_29 = arith.constant 1 : index
    %c0_30 = arith.constant 0 : index
    %c0_31 = arith.constant 0 : index
    %43 = vector.load %arg2[%c1_29, %c0_30, %c0_31] : memref<3x128x128xbf16, #tpu.memory_space<vmem>>, vector<1x128x128xbf16>
    %44 = vector.shape_cast %43 : vector<1x128x128xbf16> to vector<128x128xbf16>
    %cst_32 = arith.constant dense<0.000000e+00> : vector<128x128xf32>
    %45 = tpu.matmul %42, %44, %cst_32 {dimension_numbers = #tpu.dot_dimension_numbers<[1], [0], [0], [1], [0, 0, 1, 1], [], []>} : vector<128x128xbf16>, vector<128x128xbf16>, vector<128x128xf32> -> vector<128x128xf32>
    %46 = vector.extract_strided_slice %41 {offsets = [0, 0], sizes = [1, 128], strides = [1, 1]} : vector<8x128xf32> to vector<1x128xf32>
    %47 = vector.broadcast %46 : vector<1x128xf32> to vector<128x128xf32>
    %48 = arith.addf %45, %47 : vector<128x128xf32>
    %cst_33 = arith.constant 0.000000e+00 : f32
    %49 = vector.broadcast %cst_33 : f32 to vector<128x128xf32>
    %50 = arith.maximumf %48, %49 : vector<128x128xf32>
    %51 = arith.truncf %50 : vector<128x128xf32> to vector<128x128xbf16>
    %c1_34 = arith.constant 1 : index
    %c0_35 = arith.constant 0 : index
    %c0_36 = arith.constant 0 : index
    %52 = vector.load %arg3[%c1_34, %c0_35, %c0_36] : memref<3x128x128xbf16, #tpu.memory_space<vmem>>, vector<1x128x128xbf16>
    %53 = vector.shape_cast %52 : vector<1x128x128xbf16> to vector<128x128xbf16>
    %cst_37 = arith.constant dense<0.000000e+00> : vector<128x128xf32>
    %54 = tpu.matmul %51, %53, %cst_37 {dimension_numbers = #tpu.dot_dimension_numbers<[1], [0], [0], [1], [0, 0, 1, 1], [], []>} : vector<128x128xbf16>, vector<128x128xbf16>, vector<128x128xf32> -> vector<128x128xf32>
    %55 = vector.extract_strided_slice %41 {offsets = [1, 0], sizes = [1, 128], strides = [1, 1]} : vector<8x128xf32> to vector<1x128xf32>
    %56 = vector.broadcast %55 : vector<1x128xf32> to vector<128x128xf32>
    %57 = arith.addf %54, %56 : vector<128x128xf32>
    %cst_38 = arith.constant 0.000000e+00 : f32
    %58 = vector.broadcast %cst_38 : f32 to vector<128x128xf32>
    %59 = arith.maximumf %57, %58 : vector<128x128xf32>
    %60 = vector.extract_strided_slice %41 {offsets = [2, 0], sizes = [1, 128], strides = [1, 1]} : vector<8x128xf32> to vector<1x128xf32>
    %61 = vector.broadcast %60 : vector<1x128xf32> to vector<128x128xf32>
    %62 = arith.mulf %59, %61 : vector<128x128xf32>
    %63 = vector.extract_strided_slice %41 {offsets = [3, 0], sizes = [1, 128], strides = [1, 1]} : vector<8x128xf32> to vector<1x128xf32>
    %64 = vector.broadcast %63 : vector<1x128xf32> to vector<128x128xf32>
    %65 = arith.addf %62, %64 : vector<128x128xf32>
    %66 = arith.truncf %65 : vector<128x128xf32> to vector<128x128xbf16>
    %c0_39 = arith.constant 0 : index
    %c0_40 = arith.constant 0 : index
    %67 = vector.load %arg6[%c0_39, %c0_40] : memref<8x128xbf16, #tpu.memory_space<vmem>>, vector<8x128xbf16>
    %cst_41 = arith.constant dense<0.000000e+00> : vector<8x128xf32>
    %68 = tpu.matmul %67, %66, %cst_41 {dimension_numbers = #tpu.dot_dimension_numbers<[1], [0], [0], [1], [0, 0, 1, 1], [], []>} : vector<8x128xbf16>, vector<128x128xbf16>, vector<8x128xf32> -> vector<8x128xf32>
    %69 = arith.truncf %68 : vector<8x128xf32> to vector<8x128xbf16>
    %c1_42 = arith.constant 1 : index
    %c0_43 = arith.constant 0 : index
    %c0_44 = arith.constant 0 : index
    %70 = vector.load %arg5[%c1_42, %c0_43, %c0_44] : memref<3x128x128xbf16, #tpu.memory_space<vmem>>, vector<1x128x128xbf16>
    %71 = vector.shape_cast %70 : vector<1x128x128xbf16> to vector<128x128xbf16>
    %cst_45 = arith.constant dense<0.000000e+00> : vector<8x128xf32>
    %72 = tpu.matmul %69, %71, %cst_45 {dimension_numbers = #tpu.dot_dimension_numbers<[1], [0], [0], [1], [0, 0, 1, 1], [], []>} : vector<8x128xbf16>, vector<128x128xbf16>, vector<8x128xf32> -> vector<8x128xf32>
    %73 = arith.addf %37, %72 : vector<8x128xf32>
    %c0_46 = arith.constant 0 : index
    %c0_47 = arith.constant 0 : index
    %74 = vector.load %arg0[%c0_46, %c0_47] : memref<128x128xbf16, #tpu.memory_space<vmem>>, vector<128x128xbf16>
    %cst_48 = arith.constant dense<0.000000e+00> : vector<128x128xf32>
    %75 = tpu.matmul %74, %66, %cst_48 {dimension_numbers = #tpu.dot_dimension_numbers<[1], [0], [0], [1], [0, 0, 1, 1], [], []>} : vector<128x128xbf16>, vector<128x128xbf16>, vector<128x128xf32> -> vector<128x128xf32>
    %c2 = arith.constant 2 : index
    %c0_49 = arith.constant 0 : index
    %c0_50 = arith.constant 0 : index
    %76 = vector.load %arg4[%c2, %c0_49, %c0_50] : memref<3x8x128xf32, #tpu.memory_space<vmem>>, vector<1x8x128xf32>
    %77 = vector.shape_cast %76 : vector<1x8x128xf32> to vector<8x128xf32>
    %78 = arith.truncf %75 : vector<128x128xf32> to vector<128x128xbf16>
    %c2_51 = arith.constant 2 : index
    %c0_52 = arith.constant 0 : index
    %c0_53 = arith.constant 0 : index
    %79 = vector.load %arg2[%c2_51, %c0_52, %c0_53] : memref<3x128x128xbf16, #tpu.memory_space<vmem>>, vector<1x128x128xbf16>
    %80 = vector.shape_cast %79 : vector<1x128x128xbf16> to vector<128x128xbf16>
    %cst_54 = arith.constant dense<0.000000e+00> : vector<128x128xf32>
    %81 = tpu.matmul %78, %80, %cst_54 {dimension_numbers = #tpu.dot_dimension_numbers<[1], [0], [0], [1], [0, 0, 1, 1], [], []>} : vector<128x128xbf16>, vector<128x128xbf16>, vector<128x128xf32> -> vector<128x128xf32>
    %82 = vector.extract_strided_slice %77 {offsets = [0, 0], sizes = [1, 128], strides = [1, 1]} : vector<8x128xf32> to vector<1x128xf32>
    %83 = vector.broadcast %82 : vector<1x128xf32> to vector<128x128xf32>
    %84 = arith.addf %81, %83 : vector<128x128xf32>
    %cst_55 = arith.constant 0.000000e+00 : f32
    %85 = vector.broadcast %cst_55 : f32 to vector<128x128xf32>
    %86 = arith.maximumf %84, %85 : vector<128x128xf32>
    %87 = arith.truncf %86 : vector<128x128xf32> to vector<128x128xbf16>
    %c2_56 = arith.constant 2 : index
    %c0_57 = arith.constant 0 : index
    %c0_58 = arith.constant 0 : index
    %88 = vector.load %arg3[%c2_56, %c0_57, %c0_58] : memref<3x128x128xbf16, #tpu.memory_space<vmem>>, vector<1x128x128xbf16>
    %89 = vector.shape_cast %88 : vector<1x128x128xbf16> to vector<128x128xbf16>
    %cst_59 = arith.constant dense<0.000000e+00> : vector<128x128xf32>
    %90 = tpu.matmul %87, %89, %cst_59 {dimension_numbers = #tpu.dot_dimension_numbers<[1], [0], [0], [1], [0, 0, 1, 1], [], []>} : vector<128x128xbf16>, vector<128x128xbf16>, vector<128x128xf32> -> vector<128x128xf32>
    %91 = vector.extract_strided_slice %77 {offsets = [1, 0], sizes = [1, 128], strides = [1, 1]} : vector<8x128xf32> to vector<1x128xf32>
    %92 = vector.broadcast %91 : vector<1x128xf32> to vector<128x128xf32>
    %93 = arith.addf %90, %92 : vector<128x128xf32>
    %cst_60 = arith.constant 0.000000e+00 : f32
    %94 = vector.broadcast %cst_60 : f32 to vector<128x128xf32>
    %95 = arith.maximumf %93, %94 : vector<128x128xf32>
    %96 = vector.extract_strided_slice %77 {offsets = [2, 0], sizes = [1, 128], strides = [1, 1]} : vector<8x128xf32> to vector<1x128xf32>
    %97 = vector.broadcast %96 : vector<1x128xf32> to vector<128x128xf32>
    %98 = arith.mulf %95, %97 : vector<128x128xf32>
    %99 = vector.extract_strided_slice %77 {offsets = [3, 0], sizes = [1, 128], strides = [1, 1]} : vector<8x128xf32> to vector<1x128xf32>
    %100 = vector.broadcast %99 : vector<1x128xf32> to vector<128x128xf32>
    %101 = arith.addf %98, %100 : vector<128x128xf32>
    %102 = arith.truncf %101 : vector<128x128xf32> to vector<128x128xbf16>
    %c0_61 = arith.constant 0 : index
    %c0_62 = arith.constant 0 : index
    %103 = vector.load %arg6[%c0_61, %c0_62] : memref<8x128xbf16, #tpu.memory_space<vmem>>, vector<8x128xbf16>
    %cst_63 = arith.constant dense<0.000000e+00> : vector<8x128xf32>
    %104 = tpu.matmul %103, %102, %cst_63 {dimension_numbers = #tpu.dot_dimension_numbers<[1], [0], [0], [1], [0, 0, 1, 1], [], []>} : vector<8x128xbf16>, vector<128x128xbf16>, vector<8x128xf32> -> vector<8x128xf32>
    %105 = arith.truncf %104 : vector<8x128xf32> to vector<8x128xbf16>
    %c2_64 = arith.constant 2 : index
    %c0_65 = arith.constant 0 : index
    %c0_66 = arith.constant 0 : index
    %106 = vector.load %arg5[%c2_64, %c0_65, %c0_66] : memref<3x128x128xbf16, #tpu.memory_space<vmem>>, vector<1x128x128xbf16>
    %107 = vector.shape_cast %106 : vector<1x128x128xbf16> to vector<128x128xbf16>
    %cst_67 = arith.constant dense<0.000000e+00> : vector<8x128xf32>
    %108 = tpu.matmul %105, %107, %cst_67 {dimension_numbers = #tpu.dot_dimension_numbers<[1], [0], [0], [1], [0, 0, 1, 1], [], []>} : vector<8x128xbf16>, vector<128x128xbf16>, vector<8x128xf32> -> vector<8x128xf32>
    %109 = arith.addf %73, %108 : vector<8x128xf32>
    %c0_68 = arith.constant 0 : index
    %c0_69 = arith.constant 0 : index
    %110 = vector.load %arg7[%c0_68, %c0_69] : memref<8x1xf32, #tpu.memory_space<vmem>>, vector<8x1xf32>
    %111 = vector.broadcast %110 : vector<8x1xf32> to vector<8x128xf32>
    %112 = arith.mulf %111, %109 : vector<8x128xf32>
    %c0_70 = arith.constant 0 : index
    %c0_71 = arith.constant 0 : index
    %113 = vector.load %arg8[%c0_70, %c0_71] : memref<1x128xf32, #tpu.memory_space<vmem>>, vector<1x128xf32>
    %114 = vector.broadcast %113 : vector<1x128xf32> to vector<8x128xf32>
    %115 = arith.addf %112, %114 : vector<8x128xf32>
    %cst_72 = arith.constant 0.000000e+00 : f32
    %116 = vector.broadcast %cst_72 : f32 to vector<8x128xf32>
    %117 = arith.maximumf %115, %116 : vector<8x128xf32>
    %c0_73 = arith.constant 0 : index
    %c0_74 = arith.constant 0 : index
    %118 = vector.load %arg9[%c0_73, %c0_74] : memref<1x128xf32, #tpu.memory_space<vmem>>, vector<1x128xf32>
    %119 = vector.broadcast %118 : vector<1x128xf32> to vector<8x128xf32>
    %120 = arith.mulf %117, %119 : vector<8x128xf32>
    %cst_75 = arith.constant dense<0.000000e+00> : vector<8xf32>
    %121 = vector.multi_reduction <add>, %120, %cst_75 [1] : vector<8x128xf32> to vector<8xf32>
    %122 = vector.shape_cast %121 : vector<8xf32> to vector<8x1xf32>
    %c0_76 = arith.constant 0 : index
    %c0_77 = arith.constant 0 : index
    %123 = vector.load %arg10[%c0_76, %c0_77] : memref<1x1xf32, #tpu.memory_space<vmem>>, vector<1x1xf32>
    %124 = vector.broadcast %123 : vector<1x1xf32> to vector<8x1xf32>
    %125 = arith.addf %122, %124 : vector<8x1xf32>
    %c0_78 = arith.constant 0 : index
    %c0_79 = arith.constant 0 : index
    %126 = vector.load %arg11[%c0_78, %c0_79] : memref<8x1xf32, #tpu.memory_space<vmem>>, vector<8x1xf32>
    tpu.vector_store %arg11[%c0_78, %c0_79], %125 {strides = array<i32>} : memref<8x1xf32, #tpu.memory_space<vmem>>, vector<8x1xf32>,
    return
  }
}

</mosaic_0001>

<llo_original>
// kernel: tpu_custom_call.1
$region0: #{tpu_custom_call.1}
  #allocation0 [shape = 'u32[]', space=smem, size = 0x4, offset = 0x4, fixed_abs, tag = 'smem constant byte address 0x4 - core index']
  #allocation1 [shape = 'u32[144,128]{1,0:T(1,128)}', space=vmem, size = 0x12000, scoped, tag = 'internal scratch']
  #allocation2 [shape = 'f32[1,1]{1,0:T(1,128)S(1)}', space=vmem, size = 0x200, scoped, tag = 'scoped memory for tpu_custom_call.1']
  %s0 = inlined_call_operand.hbm [shape: bf16[128,128], index: 0, kind: input, shape index: {}]
  %s1 = inlined_call_operand.hbm [shape: bf16[128,128], index: 1, kind: input, shape index: {}]
  %s2 = inlined_call_operand.hbm [shape: bf16[3,128,128], index: 2, kind: input, shape index: {}]
  %s3 = inlined_call_operand.hbm [shape: bf16[3,128,128], index: 3, kind: input, shape index: {}]
  %s4 = inlined_call_operand.hbm [shape: f32[3,8,128], index: 4, kind: input, shape index: {}]
  %s5 = inlined_call_operand.hbm [shape: bf16[3,128,128], index: 5, kind: input, shape index: {}]
  %s6 = inlined_call_operand.vmem [shape: bf16[8,128], index: 6, kind: input, shape index: {}]
  %s7 = inlined_call_operand.vmem [shape: f32[8,1], index: 7, kind: input, shape index: {}]
  %s8 = inlined_call_operand.vmem [shape: f32[1,128], index: 8, kind: input, shape index: {}]
  %s9 = inlined_call_operand.vmem [shape: f32[1,128], index: 9, kind: input, shape index: {}]
  %s10 = inlined_call_operand.<no memory space> [shape: f32[1,1], index: 10, kind: input, shape index: {}]
  %s11 = inlined_call_operand.vmem [shape: f32[8,1], index: 11, kind: output, shape index: {}]
  %s12 = sld [smem:[#allocation0]]
  $region78: #{tpu_custom_call.1} parent=0
    _
  %s14 = ssub.s32 1, %s12
  %s15 = scalar_select 0, %s14, %s12
  %v16 = vstv %s10
  %17 = vst [vmem:[#allocation2] sm:$0x1] %v16
  $region1: #{tpu_custom_call.1} parent=0
    #allocation3 [shape = 'u8[32768]{0}', space=vmem, size = 0x8000, scoped, tag = 'input window, operand 0, single buffered']
    #allocation4 [shape = 's32[1]{0}', space=sflag, size = 0x4, scoped, tag = 'scoped memory for tpu_custom_call.1']
    #allocation5 [shape = 'u8[32768]{0}', space=vmem, size = 0x8000, scoped, tag = 'input window, operand 1, single buffered']
    #allocation6 [shape = 's32[1]{0}', space=sflag, size = 0x4, scoped, tag = 'scoped memory for tpu_custom_call.1']
    #allocation7 [shape = 'u8[98304]{0}', space=vmem, size = 0x18000, scoped, tag = 'input window, operand 2, single buffered']
    #allocation8 [shape = 'u8[98304]{0}', space=vmem, size = 0x18000, scoped, tag = 'input window, operand 3, single buffered']
    #allocation9 [shape = 's32[1]{0}', space=sflag, size = 0x4, scoped, tag = 'scoped memory for tpu_custom_call.1']
    #allocation10 [shape = 'u8[12288]{0}', space=vmem, size = 0x3000, scoped, tag = 'input window, operand 4, single buffered']
    #allocation11 [shape = 'u8[98304]{0}', space=vmem, size = 0x18000, scoped, tag = 'input window, operand 5, single buffered']
    #allocation12 [shape = 's32[1]{0}', space=sflag, size = 0x4, scoped, tag = 'scoped memory for tpu_custom_call.1']
    %18 = vsyncpa [#allocation4], 0
    %19 = vsyncpa [#allocation6], 0
    %20 = vsyncpa [#allocation9], 0
    %21 = vsyncpa [#allocation12], 0
    // Predicated region
    $region2: #{tpu_custom_call.1} parent=1 // pred_check
      _
    $region3: #{tpu_custom_call.1} parent=1 // pred_check_branch
      %23 = sbr.rel (0) target = $region5
    $region4: #{tpu_custom_call.1} parent=1 // pred_region
      %s25 = ssub.s32 1024, 1024
      %26 = vsyncadd [#allocation4], %s25
      %s27 = sshll.u32 [#allocation3], 4
      %s28 = int_to_ptr.vmem [resolvable:$true] %s27
      %33 = dma.hbm_to_vmem [thread:$0]  %s0, 1024, %s28, [#allocation4], 64, 64, 4
    $region5: #{tpu_custom_call.1} parent=1 // pred_fallthru
      _
    // Predicated region
    $region6: #{tpu_custom_call.1} parent=1 // pred_check
      _
    $region7: #{tpu_custom_call.1} parent=1 // pred_check_branch
      %35 = sbr.rel (0) target = $region9
    $region8: #{tpu_custom_call.1} parent=1 // pred_region
      %s37 = ssub.s32 1024, 1024
      %38 = vsyncadd [#allocation6], %s37
      %s39 = sshll.u32 [#allocation5], 4
      %s40 = int_to_ptr.vmem [resolvable:$true] %s39
      %45 = dma.hbm_to_vmem [thread:$0]  %s1, 1024, %s40, [#allocation6], 64, 64, 4
    $region9: #{tpu_custom_call.1} parent=1 // pred_fallthru
      _
    // Predicated region
    $region10: #{tpu_custom_call.1} parent=1 // pred_check
      _
    $region11: #{tpu_custom_call.1} parent=1 // pred_check_branch
      %47 = sbr.rel (0) target = $region13
    $region12: #{tpu_custom_call.1} parent=1 // pred_region
      %s49 = ssub.s32 3072, 3072
      %50 = vsyncadd [#allocation6], %s49
      %s51 = sshll.u32 [#allocation7], 4
      %s52 = int_to_ptr.vmem [resolvable:$true] %s51
      %57 = dma.hbm_to_vmem [thread:$0]  %s2, 3072, %s52, [#allocation6], 64, 64, 4
    $region13: #{tpu_custom_call.1} parent=1 // pred_fallthru
      _
    // Predicated region
    $region14: #{tpu_custom_call.1} parent=1 // pred_check
      _
    $region15: #{tpu_custom_call.1} parent=1 // pred_check_branch
      %59 = sbr.rel (0) target = $region17
    $region16: #{tpu_custom_call.1} parent=1 // pred_region
      %s61 = ssub.s32 3072, 3072
      %62 = vsyncadd [#allocation9], %s61
      %s63 = sshll.u32 [#allocation8], 4
      %s64 = int_to_ptr.vmem [resolvable:$true] %s63
      %69 = dma.hbm_to_vmem [thread:$0]  %s3, 3072, %s64, [#allocation9], 64, 64, 4
    $region17: #{tpu_custom_call.1} parent=1 // pred_fallthru
      _
    // Predicated region
    $region18: #{tpu_custom_call.1} parent=1 // pred_check
      _
    $region19: #{tpu_custom_call.1} parent=1 // pred_check_branch
      %71 = sbr.rel (0) target = $region21
    $region20: #{tpu_custom_call.1} parent=1 // pred_region
      %s73 = ssub.s32 384, 384
      %74 = vsyncadd [#allocation9], %s73
      %s75 = sshll.u32 [#allocation10], 4
      %s76 = int_to_ptr.vmem [resolvable:$true] %s75
      %81 = dma.hbm_to_vmem [thread:$0]  %s4, 384, %s76, [#allocation9], 128, 128, 8
    $region21: #{tpu_custom_call.1} parent=1 // pred_fallthru
      _
    // Predicated region
    $region22: #{tpu_custom_call.1} parent=1 // pred_check
      _
    $region23: #{tpu_custom_call.1} parent=1 // pred_check_branch
      %83 = sbr.rel (0) target = $region25
    $region24: #{tpu_custom_call.1} parent=1 // pred_region
      %s85 = ssub.s32 3072, 3072
      %86 = vsyncadd [#allocation12], %s85
      %s87 = sshll.u32 [#allocation11], 4
      %s88 = int_to_ptr.vmem [resolvable:$true] %s87
      %93 = dma.hbm_to_vmem [thread:$0]  %s5, 3072, %s88, [#allocation12], 64, 64, 4
    $region25: #{tpu_custom_call.1} parent=1 // pred_fallthru
      _
    // Predicated region
    $region26: #{tpu_custom_call.1} parent=1 // pred_check
      _
    $region27: #{tpu_custom_call.1} parent=1 // pred_check_branch
      %95 = sbr.rel (0) target = $region29
    $region28: #{tpu_custom_call.1} parent=1 // pred_region
      _
    $region29: #{tpu_custom_call.1} parent=1 // pred_fallthru
      _
    // Predicated region
    $region30: #{tpu_custom_call.1} parent=1 // pred_check
      _
    $region31: #{tpu_custom_call.1} parent=1 // pred_check_branch
      %97 = sbr.rel (0) target = $region33
    $region32: #{tpu_custom_call.1} parent=1 // pred_region
      _
    $region33: #{tpu_custom_call.1} parent=1 // pred_fallthru
      _
    // Predicated region
    $region34: #{tpu_custom_call.1} parent=1 // pred_check
      _
    $region35: #{tpu_custom_call.1} parent=1 // pred_check_branch
      %99 = sbr.rel (0) target = $region37
    $region36: #{tpu_custom_call.1} parent=1 // pred_region
      _
    $region37: #{tpu_custom_call.1} parent=1 // pred_fallthru
      _
    // Predicated region
    $region38: #{tpu_custom_call.1} parent=1 // pred_check
      _
    $region39: #{tpu_custom_call.1} parent=1 // pred_check_branch
      %101 = sbr.rel (0) target = $region41
    $region40: #{tpu_custom_call.1} parent=1 // pred_region
      _
    $region41: #{tpu_custom_call.1} parent=1 // pred_fallthru
      _
    // Predicated region
    $region42: #{tpu_custom_call.1} parent=1 // pred_check
      _
    $region43: #{tpu_custom_call.1} parent=1 // pred_check_branch
      %103 = sbr.rel (0) target = $region45
    $region44: #{tpu_custom_call.1} parent=1 // pred_region
      _
    $region45: #{tpu_custom_call.1} parent=1 // pred_fallthru
      _
    // Predicated region
    $region46: #{tpu_custom_call.1} parent=1 // pred_check
      _
    $region47: #{tpu_custom_call.1} parent=1 // pred_check_branch
      %105 = sbr.rel (0) target = $region49
    $region48: #{tpu_custom_call.1} parent=1 // pred_region
      %106 = dma.done [#allocation4], 1024
    $region49: #{tpu_custom_call.1} parent=1 // pred_fallthru
      _
    // Predicated region
    $region50: #{tpu_custom_call.1} parent=1 // pred_check
      _
    $region51: #{tpu_custom_call.1} parent=1 // pred_check_branch
      %108 = sbr.rel (0) target = $region53
    $region52: #{tpu_custom_call.1} parent=1 // pred_region
      %109 = dma.done [#allocation6], 1024
    $region53: #{tpu_custom_call.1} parent=1 // pred_fallthru
      _
    // Predicated region
    $region54: #{tpu_custom_call.1} parent=1 // pred_check
      _
    $region55: #{tpu_custom_call.1} parent=1 // pred_check_branch
      %111 = sbr.rel (0) target = $region57
    $region56: #{tpu_custom_call.1} parent=1 // pred_region
      %112 = dma.done [#allocation6], 3072
    $region57: #{tpu_custom_call.1} parent=1 // pred_fallthru
      _
    // Predicated region
    $region58: #{tpu_custom_call.1} parent=1 // pred_check
      _
    $region59: #{tpu_custom_call.1} parent=1 // pred_check_branch
      %114 = sbr.rel (0) target = $region61
    $region60: #{tpu_custom_call.1} parent=1 // pred_region
      %115 = dma.done [#allocation9], 3072
    $region61: #{tpu_custom_call.1} parent=1 // pred_fallthru
      _
    // Predicated region
    $region62: #{tpu_custom_call.1} parent=1 // pred_check
      _
    $region63: #{tpu_custom_call.1} parent=1 // pred_check_branch
      %117 = sbr.rel (0) target = $region65
    $region64: #{tpu_custom_call.1} parent=1 // pred_region
      %118 = dma.done [#allocation9], 384
    $region65: #{tpu_custom_call.1} parent=1 // pred_fallthru
      _
    // Predicated region
    $region66: #{tpu_custom_call.1} parent=1 // pred_check
      _
    $region67: #{tpu_custom_call.1} parent=1 // pred_check_branch
      %120 = sbr.rel (0) target = $region69
    $region68: #{tpu_custom_call.1} parent=1 // pred_region
      %121 = dma.done [#allocation12], 3072
    $region69: #{tpu_custom_call.1} parent=1 // pred_fallthru
      _
    %v123 = vld [vmem:[#allocation5] sm:$0xf]
    %v124 = vld [vmem:[#allocation5 + $0x4] sm:$0xf]
    %v125 = vld [vmem:[#allocation5 + $0x8] sm:$0xf]
    %v126 = vld [vmem:[#allocation5 + $0xc] sm:$0xf]
    %v127 = vld [vmem:[#allocation5 + $0x10] sm:$0xf]
    %v128 = vld [vmem:[#allocation5 + $0x14] sm:$0xf]
    %v129 = vld [vmem:[#allocation5 + $0x18] sm:$0xf]
    %v130 = vld [vmem:[#allocation5 + $0x1c] sm:$0xf]
    %v131 = vld [vmem:[#allocation5 + $0x20] sm:$0xf]
    %v132 = vld [vmem:[#allocation5 + $0x24] sm:$0xf]
    %v133 = vld [vmem:[#allocation5 + $0x28] sm:$0xf]
    %v134 = vld [vmem:[#allocation5 + $0x2c] sm:$0xf]
    %v135 = vld [vmem:[#allocation5 + $0x30] sm:$0xf]
    %v136 = vld [vmem:[#allocation5 + $0x34] sm:$0xf]
    %v137 = vld [vmem:[#allocation5 + $0x38] sm:$0xf]
    %v138 = vld [vmem:[#allocation5 + $0x3c] sm:$0xf]
    %v139 = vld [vmem:[#allocation3] sm:$0xf]
    %v140 = vld [vmem:[#allocation3 + $0x4] sm:$0xf]
    %v141 = vld [vmem:[#allocation3 + $0x8] sm:$0xf]
    %v142 = vld [vmem:[#allocation3 + $0xc] sm:$0xf]
    %v143 = vld [vmem:[#allocation3 + $0x10] sm:$0xf]
    %v144 = vld [vmem:[#allocation3 + $0x14] sm:$0xf]
    %v145 = vld [vmem:[#allocation3 + $0x18] sm:$0xf]
    %v146 = vld [vmem:[#allocation3 + $0x1c] sm:$0xf]
    %v147 = vld [vmem:[#allocation3 + $0x20] sm:$0xf]
    %v148 = vld [vmem:[#allocation3 + $0x24] sm:$0xf]
    %v149 = vld [vmem:[#allocation3 + $0x28] sm:$0xf]
    %v150 = vld [vmem:[#allocation3 + $0x2c] sm:$0xf]
    %v151 = vld [vmem:[#allocation3 + $0x30] sm:$0xf]
    %v152 = vld [vmem:[#allocation3 + $0x34] sm:$0xf]
    %v153 = vld [vmem:[#allocation3 + $0x38] sm:$0xf]
    %v154 = vld [vmem:[#allocation3 + $0x3c] sm:$0xf]
    %v171 = vunpack.c.l.b16 %v139
    %v172 = vunpack.c.l.b16 %v140
    %v173 = vunpack.c.l.b16 %v141
    %v174 = vunpack.c.l.b16 %v142
    %v175 = vunpack.c.l.b16 %v143
    %v176 = vunpack.c.l.b16 %v144
    %v177 = vunpack.c.l.b16 %v145
    %v178 = vunpack.c.l.b16 %v146
    %v179 = vunpack.c.l.b16 %v147
    %v180 = vunpack.c.l.b16 %v148
    %v181 = vunpack.c.l.b16 %v149
    %v182 = vunpack.c.l.b16 %v150
    %v183 = vunpack.c.l.b16 %v151
    %v184 = vunpack.c.l.b16 %v152
    %v185 = vunpack.c.l.b16 %v153
    %v186 = vunpack.c.l.b16 %v154
    %v187 = vpack.c.b16 %v172, %v171
    %v188 = vpack.c.b16 %v174, %v173
    %v189 = vpack.c.b16 %v176, %v175
    %v190 = vpack.c.b16 %v178, %v177
    %v191 = vpack.c.b16 %v180, %v179
    %v192 = vpack.c.b16 %v182, %v181
    %v193 = vpack.c.b16 %v184, %v183
    %v194 = vpack.c.b16 %v186, %v185
    %v219 = vunpack.c.l.b16 %v123
    %v220 = vunpack.c.l.b16 %v124
    %v221 = vunpack.c.l.b16 %v125
    %v222 = vunpack.c.l.b16 %v126
    %v223 = vunpack.c.l.b16 %v127
    %v224 = vunpack.c.l.b16 %v128
    %v225 = vunpack.c.l.b16 %v129
    %v226 = vunpack.c.l.b16 %v130
    %v227 = vunpack.c.l.b16 %v131
    %v228 = vunpack.c.l.b16 %v132
    %v229 = vunpack.c.l.b16 %v133
    %v230 = vunpack.c.l.b16 %v134
    %v231 = vunpack.c.l.b16 %v135
    %v232 = vunpack.c.l.b16 %v136
    %v233 = vunpack.c.l.b16 %v137
    %v234 = vunpack.c.l.b16 %v138
    %v235 = vpack.c.b16 %v220, %v219
    %v236 = vpack.c.b16 %v222, %v221
    %v237 = vpack.c.b16 %v224, %v223
    %v238 = vpack.c.b16 %v226, %v225
    %v239 = vpack.c.b16 %v228, %v227
    %v240 = vpack.c.b16 %v230, %v229
    %v241 = vpack.c.b16 %v232, %v231
    %v242 = vpack.c.b16 %v234, %v233
    %251 = vmatprep.subr.bf16.mxu0 0
    %252 = vmatpush1.bf16.msra.mxu0 %v242
    %253 = vmatprep.subr.bf16.mxu0 0
    %254 = vmatpush1.bf16.msra.mxu0 %v241
    %255 = vmatprep.subr.bf16.mxu0 0
    %256 = vmatpush1.bf16.msra.mxu0 %v240
    %257 = vmatprep.subr.bf16.mxu0 0
    %258 = vmatpush1.bf16.msra.mxu0 %v239
    %259 = vmatprep.subr.bf16.mxu0 0
    %260 = vmatpush1.bf16.msra.mxu0 %v238
    %261 = vmatprep.subr.bf16.mxu0 0
    %262 = vmatpush1.bf16.msra.mxu0 %v237
    %263 = vmatprep.subr.bf16.mxu0 0
    %264 = vmatpush1.bf16.msra.mxu0 %v236
    %265 = vmatprep.subr.bf16.mxu0 0
    %266 = vmatpush1.bf16.msra.mxu0 %v235
    %267 = vmatprep.subr.bf16.mxu0 0
    %268 = vmatpush2.bf16.msra.mxu0 0
    %269 = vmatprep.subr.bf16.mxu0 0
    %270 = vmatpush2.bf16.msra.mxu0 0
    %271 = vmatprep.subr.bf16.mxu0 0
    %272 = vmatpush2.bf16.msra.mxu0 0
    %273 = vmatprep.subr.bf16.mxu0 0
    %274 = vmatpush2.bf16.msra.mxu0 0
    %275 = vmatprep.subr.bf16.mxu0 0
    %276 = vmatpush2.bf16.msra.mxu0 0
    %277 = vmatprep.subr.bf16.mxu0 0
    %278 = vmatpush2.bf16.msra.mxu0 0
    %279 = vmatprep.subr.bf16.mxu0 0
    %280 = vmatpush2.bf16.msra.mxu0 0
    %281 = vmatprep.subr.bf16.mxu0 0
    %282 = vmatpush2.bf16.msra.mxu0 0
    %283 = vmatprep.mubr.bf16.mxu0 0
    %284 = vmatmul.mubr.bf16.gmra.mxu0 %v187
    %v285 = vpop.f32.mrf.mxu0
    %v286 = vadd.f32 0.0, %v285
    %v287 = vpop.f32.mrf.mxu0
    %v288 = vpop.f32.mrf.mxu0
    %v289 = vadd.f32 0.0, %v288
    %v290 = vpop.f32.mrf.mxu0
    %291 = vmatprep.mubr.bf16.mxu0 0
    %292 = vmatmul.mubr.bf16.gmra.mxu0 %v188
    %v293 = vpop.f32.mrf.mxu0
    %v294 = vadd.f32 0.0, %v293
    %v295 = vpop.f32.mrf.mxu0
    %v296 = vpop.f32.mrf.mxu0
    %v297 = vadd.f32 0.0, %v296
    %v298 = vpop.f32.mrf.mxu0
    %299 = vmatprep.mubr.bf16.mxu0 0
    %300 = vmatmul.mubr.bf16.gmra.mxu0 %v189
    %v301 = vpop.f32.mrf.mxu0
    %v302 = vadd.f32 0.0, %v301
    %v303 = vpop.f32.mrf.mxu0
    %v304 = vpop.f32.mrf.mxu0
    %v305 = vadd.f32 0.0, %v304
    %v306 = vpop.f32.mrf.mxu0
    %307 = vmatprep.mubr.bf16.mxu0 0
    %308 = vmatmul.mubr.bf16.gmra.mxu0 %v190
    %v309 = vpop.f32.mrf.mxu0
    %v310 = vadd.f32 0.0, %v309
    %v311 = vpop.f32.mrf.mxu0
    %v312 = vpop.f32.mrf.mxu0
    %v313 = vadd.f32 0.0, %v312
    %v314 = vpop.f32.mrf.mxu0
    %315 = vmatprep.mubr.bf16.mxu0 0
    %316 = vmatmul.mubr.bf16.gmra.mxu0 %v191
    %v317 = vpop.f32.mrf.mxu0
    %v318 = vadd.f32 0.0, %v317
    %v319 = vpop.f32.mrf.mxu0
    %v320 = vpop.f32.mrf.mxu0
    %v321 = vadd.f32 0.0, %v320
    %v322 = vpop.f32.mrf.mxu0
    %323 = vmatprep.mubr.bf16.mxu0 0
    %324 = vmatmul.mubr.bf16.gmra.mxu0 %v192
    %v325 = vpop.f32.mrf.mxu0
    %v326 = vadd.f32 0.0, %v325
    %v327 = vpop.f32.mrf.mxu0
    %v328 = vpop.f32.mrf.mxu0
    %v329 = vadd.f32 0.0, %v328
    %v330 = vpop.f32.mrf.mxu0
    %331 = vmatprep.mubr.bf16.mxu0 0
    %332 = vmatmul.mubr.bf16.gmra.mxu0 %v193
    %v333 = vpop.f32.mrf.mxu0
    %v334 = vadd.f32 0.0, %v333
    %v335 = vpop.f32.mrf.mxu0
    %v336 = vpop.f32.mrf.mxu0
    %v337 = vadd.f32 0.0, %v336
    %v338 = vpop.f32.mrf.mxu0
    %339 = vmatprep.mubr.bf16.mxu0 0
    %340 = vmatmul.mubr.bf16.gmra.mxu0 %v194
    %v341 = vpop.f32.mrf.mxu0
    %v342 = vadd.f32 0.0, %v341
    %v343 = vpop.f32.mrf.mxu0
    %v344 = vpop.f32.mrf.mxu0
    %v345 = vadd.f32 0.0, %v344
    %v346 = vpop.f32.mrf.mxu0
    %347 = vdwg.mxu0
    %v348 = vld [vmem:[#allocation10] sm:$0xff]
    %v349 = vpack.c.bf16 %v289, %v286
    %v350 = vpack.c.bf16 %v297, %v294
    %v351 = vpack.c.bf16 %v305, %v302
    %v352 = vpack.c.bf16 %v313, %v310
    %v353 = vpack.c.bf16 %v321, %v318
    %v354 = vpack.c.bf16 %v329, %v326
    %v355 = vpack.c.bf16 %v337, %v334
    %v356 = vpack.c.bf16 %v345, %v342
    %v357 = vld [vmem:[#allocation7] sm:$0xf]
    %v358 = vld [vmem:[#allocation7 + $0x4] sm:$0xf]
    %v359 = vld [vmem:[#allocation7 + $0x8] sm:$0xf]
    %v360 = vld [vmem:[#allocation7 + $0xc] sm:$0xf]
    %v361 = vld [vmem:[#allocation7 + $0x10] sm:$0xf]
    %v362 = vld [vmem:[#allocation7 + $0x14] sm:$0xf]
    %v363 = vld [vmem:[#allocation7 + $0x18] sm:$0xf]
    %v364 = vld [vmem:[#allocation7 + $0x1c] sm:$0xf]
    %v365 = vld [vmem:[#allocation7 + $0x20] sm:$0xf]
    %v366 = vld [vmem:[#allocation7 + $0x24] sm:$0xf]
    %v367 = vld [vmem:[#allocation7 + $0x28] sm:$0xf]
    %v368 = vld [vmem:[#allocation7 + $0x2c] sm:$0xf]
    %v369 = vld [vmem:[#allocation7 + $0x30] sm:$0xf]
    %v370 = vld [vmem:[#allocation7 + $0x34] sm:$0xf]
    %v371 = vld [vmem:[#allocation7 + $0x38] sm:$0xf]
    %v372 = vld [vmem:[#allocation7 + $0x3c] sm:$0xf]
    %v373 = vlaneseq
    %v374 = vshrl.u32 %v373, 7
    %v375 = vsub.s32 0, %v374
    %v376 = vrot.slane %v348, %v375
    %v393 = vunpack.c.l.b16 %v357
    %v394 = vunpack.c.l.b16 %v358
    %v395 = vunpack.c.l.b16 %v359
    %v396 = vunpack.c.l.b16 %v360
    %v397 = vunpack.c.l.b16 %v361
    %v398 = vunpack.c.l.b16 %v362
    %v399 = vunpack.c.l.b16 %v363
    %v400 = vunpack.c.l.b16 %v364
    %v401 = vunpack.c.l.b16 %v365
    %v402 = vunpack.c.l.b16 %v366
    %v403 = vunpack.c.l.b16 %v367
    %v404 = vunpack.c.l.b16 %v368
    %v405 = vunpack.c.l.b16 %v369
    %v406 = vunpack.c.l.b16 %v370
    %v407 = vunpack.c.l.b16 %v371
    %v408 = vunpack.c.l.b16 %v372
    %v409 = vpack.c.b16 %v394, %v393
    %v410 = vpack.c.b16 %v396, %v395
    %v411 = vpack.c.b16 %v398, %v397
    %v412 = vpack.c.b16 %v400, %v399
    %v413 = vpack.c.b16 %v402, %v401
    %v414 = vpack.c.b16 %v404, %v403
    %v415 = vpack.c.b16 %v406, %v405
    %v416 = vpack.c.b16 %v408, %v407
    %425 = vmatprep.subr.bf16.mxu0 0
    %426 = vmatpush1.bf16.msra.mxu0 %v416
    %427 = vmatprep.subr.bf16.mxu0 0
    %428 = vmatpush1.bf16.msra.mxu0 %v415
    %429 = vmatprep.subr.bf16.mxu0 0
    %430 = vmatpush1.bf16.msra.mxu0 %v414
    %431 = vmatprep.subr.bf16.mxu0 0
    %432 = vmatpush1.bf16.msra.mxu0 %v413
    %433 = vmatprep.subr.bf16.mxu0 0
    %434 = vmatpush1.bf16.msra.mxu0 %v412
    %435 = vmatprep.subr.bf16.mxu0 0
    %436 = vmatpush1.bf16.msra.mxu0 %v411
    %437 = vmatprep.subr.bf16.mxu0 0
    %438 = vmatpush1.bf16.msra.mxu0 %v410
    %439 = vmatprep.subr.bf16.mxu0 0
    %440 = vmatpush1.bf16.msra.mxu0 %v409
    %441 = vmatprep.subr.bf16.mxu0 0
    %442 = vmatpush2.bf16.msra.mxu0 0
    %443 = vmatprep.subr.bf16.mxu0 0
    %444 = vmatpush2.bf16.msra.mxu0 0
    %445 = vmatprep.subr.bf16.mxu0 0
    %446 = vmatpush2.bf16.msra.mxu0 0
    %447 = vmatprep.subr.bf16.mxu0 0
    %448 = vmatpush2.bf16.msra.mxu0 0
    %449 = vmatprep.subr.bf16.mxu0 0
    %450 = vmatpush2.bf16.msra.mxu0 0
    %451 = vmatprep.subr.bf16.mxu0 0
    %452 = vmatpush2.bf16.msra.mxu0 0
    %453 = vmatprep.subr.bf16.mxu0 0
    %454 = vmatpush2.bf16.msra.mxu0 0
    %455 = vmatprep.subr.bf16.mxu0 0
    %456 = vmatpush2.bf16.msra.mxu0 0
    %457 = vmatprep.mubr.bf16.mxu0 0
    %458 = vmatmul.mubr.bf16.gmra.mxu0 %v349
    %v459 = vpop.f32.mrf.mxu0
    %v460 = vadd.f32 %v376, %v459
    %v461 = vpop.f32.mrf.mxu0
    %v462 = vpop.f32.mrf.mxu0
    %v463 = vadd.f32 %v376, %v462
    %v464 = vpop.f32.mrf.mxu0
    %465 = vmatprep.mubr.bf16.mxu0 0
    %466 = vmatmul.mubr.bf16.gmra.mxu0 %v350
    %v467 = vpop.f32.mrf.mxu0
    %v468 = vadd.f32 %v376, %v467
    %v469 = vpop.f32.mrf.mxu0
    %v470 = vpop.f32.mrf.mxu0
    %v471 = vadd.f32 %v376, %v470
    %v472 = vpop.f32.mrf.mxu0
    %473 = vmatprep.mubr.bf16.mxu0 0
    %474 = vmatmul.mubr.bf16.gmra.mxu0 %v351
    %v475 = vpop.f32.mrf.mxu0
    %v476 = vadd.f32 %v376, %v475
    %v477 = vpop.f32.mrf.mxu0
    %v478 = vpop.f32.mrf.mxu0
    %v479 = vadd.f32 %v376, %v478
    %v480 = vpop.f32.mrf.mxu0
    %481 = vmatprep.mubr.bf16.mxu0 0
    %482 = vmatmul.mubr.bf16.gmra.mxu0 %v352
    %v483 = vpop.f32.mrf.mxu0
    %v484 = vadd.f32 %v376, %v483
    %v485 = vpop.f32.mrf.mxu0
    %v486 = vpop.f32.mrf.mxu0
    %v487 = vadd.f32 %v376, %v486
    %v488 = vpop.f32.mrf.mxu0
    %489 = vmatprep.mubr.bf16.mxu0 0
    %490 = vmatmul.mubr.bf16.gmra.mxu0 %v353
    %v491 = vpop.f32.mrf.mxu0
    %v492 = vadd.f32 %v376, %v491
    %v493 = vpop.f32.mrf.mxu0
    %v494 = vpop.f32.mrf.mxu0
    %v495 = vadd.f32 %v376, %v494
    %v496 = vpop.f32.mrf.mxu0
    %497 = vmatprep.mubr.bf16.mxu0 0
    %498 = vmatmul.mubr.bf16.gmra.mxu0 %v354
    %v499 = vpop.f32.mrf.mxu0
    %v500 = vadd.f32 %v376, %v499
    %v501 = vpop.f32.mrf.mxu0
    %v502 = vpop.f32.mrf.mxu0
    %v503 = vadd.f32 %v376, %v502
    %v504 = vpop.f32.mrf.mxu0
    %505 = vmatprep.mubr.bf16.mxu0 0
    %506 = vmatmul.mubr.bf16.gmra.mxu0 %v355
    %v507 = vpop.f32.mrf.mxu0
    %v508 = vadd.f32 %v376, %v507
    %v509 = vpop.f32.mrf.mxu0
    %v510 = vpop.f32.mrf.mxu0
    %v511 = vadd.f32 %v376, %v510
    %v512 = vpop.f32.mrf.mxu0
    %513 = vmatprep.mubr.bf16.mxu0 0
    %514 = vmatmul.mubr.bf16.gmra.mxu0 %v356
    %v515 = vpop.f32.mrf.mxu0
    %v516 = vadd.f32 %v376, %v515
    %v517 = vpop.f32.mrf.mxu0
    %v518 = vpop.f32.mrf.mxu0
    %v519 = vadd.f32 %v376, %v518
    %v520 = vpop.f32.mrf.mxu0
    %521 = vdwg.mxu0
    %v522 = vmax.f32 %v460, 0.0
    %v523 = vmax.f32 %v463, 0.0
    %v524 = vmax.f32 %v468, 0.0
    %v525 = vmax.f32 %v471, 0.0
    %v526 = vmax.f32 %v476, 0.0
    %v527 = vmax.f32 %v479, 0.0
    %v528 = vmax.f32 %v484, 0.0
    %v529 = vmax.f32 %v487, 0.0
    %v530 = vmax.f32 %v492, 0.0
    %v531 = vmax.f32 %v495, 0.0
    %v532 = vmax.f32 %v500, 0.0
    %v533 = vmax.f32 %v503, 0.0
    %v534 = vmax.f32 %v508, 0.0
    %v535 = vmax.f32 %v511, 0.0
    %v536 = vmax.f32 %v516, 0.0
    %v537 = vmax.f32 %v519, 0.0
    %v538 = vpack.c.bf16 %v523, %v522
    %v539 = vpack.c.bf16 %v525, %v524
    %v540 = vpack.c.bf16 %v527, %v526
    %v541 = vpack.c.bf16 %v529, %v528
    %v542 = vpack.c.bf16 %v531, %v530
    %v543 = vpack.c.bf16 %v533, %v532
    %v544 = vpack.c.bf16 %v535, %v534
    %v545 = vpack.c.bf16 %v537, %v536
    %v546 = vld [vmem:[#allocation8] sm:$0xf]
    %v547 = vld [vmem:[#allocation8 + $0x4] sm:$0xf]
    %v548 = vld [vmem:[#allocation8 + $0x8] sm:$0xf]
    %v549 = vld [vmem:[#allocation8 + $0xc] sm:$0xf]
    %v550 = vld [vmem:[#allocation8 + $0x10] sm:$0xf]
    %v551 = vld [vmem:[#allocation8 + $0x14] sm:$0xf]
    %v552 = vld [vmem:[#allocation8 + $0x18] sm:$0xf]
    %v553 = vld [vmem:[#allocation8 + $0x1c] sm:$0xf]
    %v554 = vld [vmem:[#allocation8 + $0x20] sm:$0xf]
    %v555 = vld [vmem:[#allocation8 + $0x24] sm:$0xf]
    %v556 = vld [vmem:[#allocation8 + $0x28] sm:$0xf]
    %v557 = vld [vmem:[#allocation8 + $0x2c] sm:$0xf]
    %v558 = vld [vmem:[#allocation8 + $0x30] sm:$0xf]
    %v559 = vld [vmem:[#allocation8 + $0x34] sm:$0xf]
    %v560 = vld [vmem:[#allocation8 + $0x38] sm:$0xf]
    %v561 = vld [vmem:[#allocation8 + $0x3c] sm:$0xf]
    %v562 = vlaneseq
    %v563 = vshrl.u32 %v562, 7
    %v564 = vsub.s32 1, %v563
    %v565 = vrot.slane %v348, %v564
    %v582 = vunpack.c.l.b16 %v546
    %v583 = vunpack.c.l.b16 %v547
    %v584 = vunpack.c.l.b16 %v548
    %v585 = vunpack.c.l.b16 %v549
    %v586 = vunpack.c.l.b16 %v550
    %v587 = vunpack.c.l.b16 %v551
    %v588 = vunpack.c.l.b16 %v552
    %v589 = vunpack.c.l.b16 %v553
    %v590 = vunpack.c.l.b16 %v554
    %v591 = vunpack.c.l.b16 %v555
    %v592 = vunpack.c.l.b16 %v556
    %v593 = vunpack.c.l.b16 %v557
    %v594 = vunpack.c.l.b16 %v558
    %v595 = vunpack.c.l.b16 %v559
    %v596 = vunpack.c.l.b16 %v560
    %v597 = vunpack.c.l.b16 %v561
    %v598 = vpack.c.b16 %v583, %v582
    %v599 = vpack.c.b16 %v585, %v584
    %v600 = vpack.c.b16 %v587, %v586
    %v601 = vpack.c.b16 %v589, %v588
    %v602 = vpack.c.b16 %v591, %v590
    %v603 = vpack.c.b16 %v593, %v592
    %v604 = vpack.c.b16 %v595, %v594
    %v605 = vpack.c.b16 %v597, %v596
    %614 = vmatprep.subr.bf16.mxu0 0
    %615 = vmatpush1.bf16.msra.mxu0 %v605
    %616 = vmatprep.subr.bf16.mxu0 0
    %617 = vmatpush1.bf16.msra.mxu0 %v604
    %618 = vmatprep.subr.bf16.mxu0 0
    %619 = vmatpush1.bf16.msra.mxu0 %v603
    %620 = vmatprep.subr.bf16.mxu0 0
    %621 = vmatpush1.bf16.msra.mxu0 %v602
    %622 = vmatprep.subr.bf16.mxu0 0
    %623 = vmatpush1.bf16.msra.mxu0 %v601
    %624 = vmatprep.subr.bf16.mxu0 0
    %625 = vmatpush1.bf16.msra.mxu0 %v600
    %626 = vmatprep.subr.bf16.mxu0 0
    %627 = vmatpush1.bf16.msra.mxu0 %v599
    %628 = vmatprep.subr.bf16.mxu0 0
    %629 = vmatpush1.bf16.msra.mxu0 %v598
    %630 = vmatprep.subr.bf16.mxu0 0
    %631 = vmatpush2.bf16.msra.mxu0 0
    %632 = vmatprep.subr.bf16.mxu0 0
    %633 = vmatpush2.bf16.msra.mxu0 0
    %634 = vmatprep.subr.bf16.mxu0 0
    %635 = vmatpush2.bf16.msra.mxu0 0
    %636 = vmatprep.subr.bf16.mxu0 0
    %637 = vmatpush2.bf16.msra.mxu0 0
    %638 = vmatprep.subr.bf16.mxu0 0
    %639 = vmatpush2.bf16.msra.mxu0 0
    %640 = vmatprep.subr.bf16.mxu0 0
    %641 = vmatpush2.bf16.msra.mxu0 0
    %642 = vmatprep.subr.bf16.mxu0 0
    %643 = vmatpush2.bf16.msra.mxu0 0
    %644 = vmatprep.subr.bf16.mxu0 0
    %645 = vmatpush2.bf16.msra.mxu0 0
    %646 = vmatprep.mubr.bf16.mxu0 0
    %647 = vmatmul.mubr.bf16.gmra.mxu0 %v538
    %v648 = vpop.f32.mrf.mxu0
    %v649 = vadd.f32 %v565, %v648
    %v650 = vpop.f32.mrf.mxu0
    %v651 = vpop.f32.mrf.mxu0
    %v652 = vadd.f32 %v565, %v651
    %v653 = vpop.f32.mrf.mxu0
    %654 = vmatprep.mubr.bf16.mxu0 0
    %655 = vmatmul.mubr.bf16.gmra.mxu0 %v539
    %v656 = vpop.f32.mrf.mxu0
    %v657 = vadd.f32 %v565, %v656
    %v658 = vpop.f32.mrf.mxu0
    %v659 = vpop.f32.mrf.mxu0
    %v660 = vadd.f32 %v565, %v659
    %v661 = vpop.f32.mrf.mxu0
    %662 = vmatprep.mubr.bf16.mxu0 0
    %663 = vmatmul.mubr.bf16.gmra.mxu0 %v540
    %v664 = vpop.f32.mrf.mxu0
    %v665 = vadd.f32 %v565, %v664
    %v666 = vpop.f32.mrf.mxu0
    %v667 = vpop.f32.mrf.mxu0
    %v668 = vadd.f32 %v565, %v667
    %v669 = vpop.f32.mrf.mxu0
    %670 = vmatprep.mubr.bf16.mxu0 0
    %671 = vmatmul.mubr.bf16.gmra.mxu0 %v541
    %v672 = vpop.f32.mrf.mxu0
    %v673 = vadd.f32 %v565, %v672
    %v674 = vpop.f32.mrf.mxu0
    %v675 = vpop.f32.mrf.mxu0
    %v676 = vadd.f32 %v565, %v675
    %v677 = vpop.f32.mrf.mxu0
    %678 = vmatprep.mubr.bf16.mxu0 0
    %679 = vmatmul.mubr.bf16.gmra.mxu0 %v542
    %v680 = vpop.f32.mrf.mxu0
    %v681 = vadd.f32 %v565, %v680
    %v682 = vpop.f32.mrf.mxu0
    %v683 = vpop.f32.mrf.mxu0
    %v684 = vadd.f32 %v565, %v683
    %v685 = vpop.f32.mrf.mxu0
    %686 = vmatprep.mubr.bf16.mxu0 0
    %687 = vmatmul.mubr.bf16.gmra.mxu0 %v543
    %v688 = vpop.f32.mrf.mxu0
    %v689 = vadd.f32 %v565, %v688
    %v690 = vpop.f32.mrf.mxu0
    %v691 = vpop.f32.mrf.mxu0
    %v692 = vadd.f32 %v565, %v691
    %v693 = vpop.f32.mrf.mxu0
    %694 = vmatprep.mubr.bf16.mxu0 0
    %695 = vmatmul.mubr.bf16.gmra.mxu0 %v544
    %v696 = vpop.f32.mrf.mxu0
    %v697 = vadd.f32 %v565, %v696
    %v698 = vpop.f32.mrf.mxu0
    %v699 = vpop.f32.mrf.mxu0
    %v700 = vadd.f32 %v565, %v699
    %v701 = vpop.f32.mrf.mxu0
    %702 = vmatprep.mubr.bf16.mxu0 0
    %703 = vmatmul.mubr.bf16.gmra.mxu0 %v545
    %v704 = vpop.f32.mrf.mxu0
    %v705 = vadd.f32 %v565, %v704
    %v706 = vpop.f32.mrf.mxu0
    %v707 = vpop.f32.mrf.mxu0
    %v708 = vadd.f32 %v565, %v707
    %v709 = vpop.f32.mrf.mxu0
    %710 = vdwg.mxu0
    %v711 = vmax.f32 %v649, 0.0
    %v712 = vmax.f32 %v652, 0.0
    %v713 = vmax.f32 %v657, 0.0
    %v714 = vmax.f32 %v660, 0.0
    %v715 = vmax.f32 %v665, 0.0
    %v716 = vmax.f32 %v668, 0.0
    %v717 = vmax.f32 %v673, 0.0
    %v718 = vmax.f32 %v676, 0.0
    %v719 = vmax.f32 %v681, 0.0
    %v720 = vmax.f32 %v684, 0.0
    %v721 = vmax.f32 %v689, 0.0
    %v722 = vmax.f32 %v692, 0.0
    %v723 = vmax.f32 %v697, 0.0
    %v724 = vmax.f32 %v700, 0.0
    %v725 = vmax.f32 %v705, 0.0
    %v726 = vmax.f32 %v708, 0.0
    %v727 = vlaneseq
    %v728 = vshrl.u32 %v727, 7
    %v729 = vsub.s32 2, %v728
    %v730 = vrot.slane %v348, %v729
    %v731 = vmul.f32 %v711, %v730
    %v732 = vmul.f32 %v712, %v730
    %v733 = vmul.f32 %v713, %v730
    %v734 = vmul.f32 %v714, %v730
    %v735 = vmul.f32 %v715, %v730
    %v736 = vmul.f32 %v716, %v730
    %v737 = vmul.f32 %v717, %v730
    %v738 = vmul.f32 %v718, %v730
    %v739 = vmul.f32 %v719, %v730
    %v740 = vmul.f32 %v720, %v730
    %v741 = vmul.f32 %v721, %v730
    %v742 = vmul.f32 %v722, %v730
    %v743 = vmul.f32 %v723, %v730
    %v744 = vmul.f32 %v724, %v730
    %v745 = vmul.f32 %v725, %v730
    %v746 = vmul.f32 %v726, %v730
    %v747 = vlaneseq
    %v748 = vshrl.u32 %v747, 7
    %v749 = vsub.s32 3, %v748
    %v750 = vrot.slane %v348, %v749
    %v751 = vadd.f32 %v731, %v750
    %v752 = vadd.f32 %v732, %v750
    %v753 = vadd.f32 %v733, %v750
    %v754 = vadd.f32 %v734, %v750
    %v755 = vadd.f32 %v735, %v750
    %v756 = vadd.f32 %v736, %v750
    %v757 = vadd.f32 %v737, %v750
    %v758 = vadd.f32 %v738, %v750
    %v759 = vadd.f32 %v739, %v750
    %v760 = vadd.f32 %v740, %v750
    %v761 = vadd.f32 %v741, %v750
    %v762 = vadd.f32 %v742, %v750
    %v763 = vadd.f32 %v743, %v750
    %v764 = vadd.f32 %v744, %v750
    %v765 = vadd.f32 %v745, %v750
    %v766 = vadd.f32 %v746, %v750
    %v767 = vpack.c.bf16 %v752, %v751
    %v768 = vpack.c.bf16 %v754, %v753
    %v769 = vpack.c.bf16 %v756, %v755
    %v770 = vpack.c.bf16 %v758, %v757
    %v771 = vpack.c.bf16 %v760, %v759
    %v772 = vpack.c.bf16 %v762, %v761
    %v773 = vpack.c.bf16 %v764, %v763
    %v774 = vpack.c.bf16 %v766, %v765
    %v775 = vld [vmem:[%s6] sm:$0xf]
    %776 = vmatprep.subr.bf16.mxu0 0
    %777 = vmatpush1.bf16.msra.mxu0 %v774
    %778 = vmatprep.subr.bf16.mxu0 0
    %779 = vmatpush1.bf16.msra.mxu0 %v773
    %780 = vmatprep.subr.bf16.mxu0 0
    %781 = vmatpush1.bf16.msra.mxu0 %v772
    %782 = vmatprep.subr.bf16.mxu0 0
    %783 = vmatpush1.bf16.msra.mxu0 %v771
    %784 = vmatprep.subr.bf16.mxu0 0
    %785 = vmatpush1.bf16.msra.mxu0 %v770
    %786 = vmatprep.subr.bf16.mxu0 0
    %787 = vmatpush1.bf16.msra.mxu0 %v769
    %788 = vmatprep.subr.bf16.mxu0 0
    %789 = vmatpush1.bf16.msra.mxu0 %v768
    %790 = vmatprep.subr.bf16.mxu0 0
    %791 = vmatpush1.bf16.msra.mxu0 %v767
    %792 = vmatprep.subr.bf16.mxu0 0
    %793 = vmatpush2.bf16.msra.mxu0 0
    %794 = vmatprep.subr.bf16.mxu0 0
    %795 = vmatpush2.bf16.msra.mxu0 0
    %796 = vmatprep.subr.bf16.mxu0 0
    %797 = vmatpush2.bf16.msra.mxu0 0
    %798 = vmatprep.subr.bf16.mxu0 0
    %799 = vmatpush2.bf16.msra.mxu0 0
    %800 = vmatprep.subr.bf16.mxu0 0
    %801 = vmatpush2.bf16.msra.mxu0 0
    %802 = vmatprep.subr.bf16.mxu0 0
    %803 = vmatpush2.bf16.msra.mxu0 0
    %804 = vmatprep.subr.bf16.mxu0 0
    %805 = vmatpush2.bf16.msra.mxu0 0
    %806 = vmatprep.subr.bf16.mxu0 0
    %807 = vmatpush2.bf16.msra.mxu0 0
    %808 = vmatprep.mubr.bf16.mxu0 0
    %809 = vmatmul.mubr.bf16.gmra.mxu0 %v775
    %v810 = vpop.f32.mrf.mxu0
    %v811 = vadd.f32 0.0, %v810
    %v812 = vpop.f32.mrf.mxu0
    %v813 = vpop.f32.mrf.mxu0
    %v814 = vpop.f32.mrf.mxu0
    %815 = vdwg.mxu0
    %v816 = vpack.c.bf16 %v811, %v811
    %v817 = vld [vmem:[#allocation11] sm:$0xf]
    %v818 = vld [vmem:[#allocation11 + $0x4] sm:$0xf]
    %v819 = vld [vmem:[#allocation11 + $0x8] sm:$0xf]
    %v820 = vld [vmem:[#allocation11 + $0xc] sm:$0xf]
    %v821 = vld [vmem:[#allocation11 + $0x10] sm:$0xf]
    %v822 = vld [vmem:[#allocation11 + $0x14] sm:$0xf]
    %v823 = vld [vmem:[#allocation11 + $0x18] sm:$0xf]
    %v824 = vld [vmem:[#allocation11 + $0x1c] sm:$0xf]
    %v825 = vld [vmem:[#allocation11 + $0x20] sm:$0xf]
    %v826 = vld [vmem:[#allocation11 + $0x24] sm:$0xf]
    %v827 = vld [vmem:[#allocation11 + $0x28] sm:$0xf]
    %v828 = vld [vmem:[#allocation11 + $0x2c] sm:$0xf]
    %v829 = vld [vmem:[#allocation11 + $0x30] sm:$0xf]
    %v830 = vld [vmem:[#allocation11 + $0x34] sm:$0xf]
    %v831 = vld [vmem:[#allocation11 + $0x38] sm:$0xf]
    %v832 = vld [vmem:[#allocation11 + $0x3c] sm:$0xf]
    %833 = vmatprep.subr.bf16.mxu0 0
    %834 = vmatpush1.bf16.msra.mxu0 %v774
    %835 = vmatprep.subr.bf16.mxu0 0
    %836 = vmatpush1.bf16.msra.mxu0 %v773
    %837 = vmatprep.subr.bf16.mxu0 0
    %838 = vmatpush1.bf16.msra.mxu0 %v772
    %839 = vmatprep.subr.bf16.mxu0 0
    %840 = vmatpush1.bf16.msra.mxu0 %v771
    %841 = vmatprep.subr.bf16.mxu0 0
    %842 = vmatpush1.bf16.msra.mxu0 %v770
    %843 = vmatprep.subr.bf16.mxu0 0
    %844 = vmatpush1.bf16.msra.mxu0 %v769
    %845 = vmatprep.subr.bf16.mxu0 0
    %846 = vmatpush1.bf16.msra.mxu0 %v768
    %847 = vmatprep.subr.bf16.mxu0 0
    %848 = vmatpush1.bf16.msra.mxu0 %v767
    %849 = vmatprep.subr.bf16.mxu0 0
    %850 = vmatpush2.bf16.msra.mxu0 0
    %851 = vmatprep.subr.bf16.mxu0 0
    %852 = vmatpush2.bf16.msra.mxu0 0
    %853 = vmatprep.subr.bf16.mxu0 0
    %854 = vmatpush2.bf16.msra.mxu0 0
    %855 = vmatprep.subr.bf16.mxu0 0
    %856 = vmatpush2.bf16.msra.mxu0 0
    %857 = vmatprep.subr.bf16.mxu0 0
    %858 = vmatpush2.bf16.msra.mxu0 0
    %859 = vmatprep.subr.bf16.mxu0 0
    %860 = vmatpush2.bf16.msra.mxu0 0
    %861 = vmatprep.subr.bf16.mxu0 0
    %862 = vmatpush2.bf16.msra.mxu0 0
    %863 = vmatprep.subr.bf16.mxu0 0
    %864 = vmatpush2.bf16.msra.mxu0 0
    %865 = vmatprep.mubr.bf16.mxu0 0
    %866 = vmatmul.mubr.bf16.gmra.mxu0 %v187
    %v867 = vpop.f32.mrf.mxu0
    %v868 = vadd.f32 0.0, %v867
    %v869 = vpop.f32.mrf.mxu0
    %v870 = vpop.f32.mrf.mxu0
    %v871 = vadd.f32 0.0, %v870
    %v872 = vpop.f32.mrf.mxu0
    %873 = vmatprep.mubr.bf16.mxu0 0
    %874 = vmatmul.mubr.bf16.gmra.mxu0 %v188
    %v875 = vpop.f32.mrf.mxu0
    %v876 = vadd.f32 0.0, %v875
    %v877 = vpop.f32.mrf.mxu0
    %v878 = vpop.f32.mrf.mxu0
    %v879 = vadd.f32 0.0, %v878
    %v880 = vpop.f32.mrf.mxu0
    %881 = vmatprep.mubr.bf16.mxu0 0
    %882 = vmatmul.mubr.bf16.gmra.mxu0 %v189
    %v883 = vpop.f32.mrf.mxu0
    %v884 = vadd.f32 0.0, %v883
    %v885 = vpop.f32.mrf.mxu0
    %v886 = vpop.f32.mrf.mxu0
    %v887 = vadd.f32 0.0, %v886
    %v888 = vpop.f32.mrf.mxu0
    %889 = vmatprep.mubr.bf16.mxu0 0
    %890 = vmatmul.mubr.bf16.gmra.mxu0 %v190
    %v891 = vpop.f32.mrf.mxu0
    %v892 = vadd.f32 0.0, %v891
    %v893 = vpop.f32.mrf.mxu0
    %v894 = vpop.f32.mrf.mxu0
    %v895 = vadd.f32 0.0, %v894
    %v896 = vpop.f32.mrf.mxu0
    %897 = vmatprep.mubr.bf16.mxu0 0
    %898 = vmatmul.mubr.bf16.gmra.mxu0 %v191
    %v899 = vpop.f32.mrf.mxu0
    %v900 = vadd.f32 0.0, %v899
    %v901 = vpop.f32.mrf.mxu0
    %v902 = vpop.f32.mrf.mxu0
    %v903 = vadd.f32 0.0, %v902
    %v904 = vpop.f32.mrf.mxu0
    %905 = vmatprep.mubr.bf16.mxu0 0
    %906 = vmatmul.mubr.bf16.gmra.mxu0 %v192
    %v907 = vpop.f32.mrf.mxu0
    %v908 = vadd.f32 0.0, %v907
    %v909 = vpop.f32.mrf.mxu0
    %v910 = vpop.f32.mrf.mxu0
    %v911 = vadd.f32 0.0, %v910
    %v912 = vpop.f32.mrf.mxu0
    %913 = vmatprep.mubr.bf16.mxu0 0
    %914 = vmatmul.mubr.bf16.gmra.mxu0 %v193
    %v915 = vpop.f32.mrf.mxu0
    %v916 = vadd.f32 0.0, %v915
    %v917 = vpop.f32.mrf.mxu0
    %v918 = vpop.f32.mrf.mxu0
    %v919 = vadd.f32 0.0, %v918
    %v920 = vpop.f32.mrf.mxu0
    %921 = vmatprep.mubr.bf16.mxu0 0
    %922 = vmatmul.mubr.bf16.gmra.mxu0 %v194
    %v923 = vpop.f32.mrf.mxu0
    %v924 = vadd.f32 0.0, %v923
    %v925 = vpop.f32.mrf.mxu0
    %v926 = vpop.f32.mrf.mxu0
    %v927 = vadd.f32 0.0, %v926
    %v928 = vpop.f32.mrf.mxu0
    %929 = vdwg.mxu0
    %s930 = scalar_lea.vmem [#allocation10], 8
    %v931 = vld [vmem:[%s930] sm:$0xff]
    %v932 = vpack.c.bf16 %v871, %v868
    %v933 = vpack.c.bf16 %v879, %v876
    %v934 = vpack.c.bf16 %v887, %v884
    %v935 = vpack.c.bf16 %v895, %v892
    %v936 = vpack.c.bf16 %v903, %v900
    %v937 = vpack.c.bf16 %v911, %v908
    %v938 = vpack.c.bf16 %v919, %v916
    %v939 = vpack.c.bf16 %v927, %v924
    %s940 = scalar_lea.vmem [#allocation7], 64
    %v941 = vld [vmem:[%s940] sm:$0xf]
    %v942 = vld [vmem:[%s940 + $0x4] sm:$0xf]
    %v943 = vld [vmem:[%s940 + $0x8] sm:$0xf]
    %v944 = vld [vmem:[%s940 + $0xc] sm:$0xf]
    %v945 = vld [vmem:[%s940 + $0x10] sm:$0xf]
    %v946 = vld [vmem:[%s940 + $0x14] sm:$0xf]
    %v947 = vld [vmem:[%s940 + $0x18] sm:$0xf]
    %v948 = vld [vmem:[%s940 + $0x1c] sm:$0xf]
    %v949 = vld [vmem:[%s940 + $0x20] sm:$0xf]
    %v950 = vld [vmem:[%s940 + $0x24] sm:$0xf]
    %v951 = vld [vmem:[%s940 + $0x28] sm:$0xf]
    %v952 = vld [vmem:[%s940 + $0x2c] sm:$0xf]
    %v953 = vld [vmem:[%s940 + $0x30] sm:$0xf]
    %v954 = vld [vmem:[%s940 + $0x34] sm:$0xf]
    %v955 = vld [vmem:[%s940 + $0x38] sm:$0xf]
    %v956 = vld [vmem:[%s940 + $0x3c] sm:$0xf]
    %v957 = vlaneseq
    %v958 = vshrl.u32 %v957, 7
    %v959 = vsub.s32 0, %v958
    %v960 = vrot.slane %v931, %v959
    %v977 = vunpack.c.l.b16 %v941
    %v978 = vunpack.c.l.b16 %v942
    %v979 = vunpack.c.l.b16 %v943
    %v980 = vunpack.c.l.b16 %v944
    %v981 = vunpack.c.l.b16 %v945
    %v982 = vunpack.c.l.b16 %v946
    %v983 = vunpack.c.l.b16 %v947
    %v984 = vunpack.c.l.b16 %v948
    %v985 = vunpack.c.l.b16 %v949
    %v986 = vunpack.c.l.b16 %v950
    %v987 = vunpack.c.l.b16 %v951
    %v988 = vunpack.c.l.b16 %v952
    %v989 = vunpack.c.l.b16 %v953
    %v990 = vunpack.c.l.b16 %v954
    %v991 = vunpack.c.l.b16 %v955
    %v992 = vunpack.c.l.b16 %v956
    %v993 = vpack.c.b16 %v978, %v977
    %v994 = vpack.c.b16 %v980, %v979
    %v995 = vpack.c.b16 %v982, %v981
    %v996 = vpack.c.b16 %v984, %v983
    %v997 = vpack.c.b16 %v986, %v985
    %v998 = vpack.c.b16 %v988, %v987
    %v999 = vpack.c.b16 %v990, %v989
    %v1000 = vpack.c.b16 %v992, %v991
    %1009 = vmatprep.subr.bf16.mxu0 0
    %1010 = vmatpush1.bf16.msra.mxu0 %v1000
    %1011 = vmatprep.subr.bf16.mxu0 0
    %1012 = vmatpush1.bf16.msra.mxu0 %v999
    %1013 = vmatprep.subr.bf16.mxu0 0
    %1014 = vmatpush1.bf16.msra.mxu0 %v998
    %1015 = vmatprep.subr.bf16.mxu0 0
    %1016 = vmatpush1.bf16.msra.mxu0 %v997
    %1017 = vmatprep.subr.bf16.mxu0 0
    %1018 = vmatpush1.bf16.msra.mxu0 %v996
    %1019 = vmatprep.subr.bf16.mxu0 0
    %1020 = vmatpush1.bf16.msra.mxu0 %v995
    %1021 = vmatprep.subr.bf16.mxu0 0
    %1022 = vmatpush1.bf16.msra.mxu0 %v994
    %1023 = vmatprep.subr.bf16.mxu0 0
    %1024 = vmatpush1.bf16.msra.mxu0 %v993
    %1025 = vmatprep.subr.bf16.mxu0 0
    %1026 = vmatpush2.bf16.msra.mxu0 0
    %1027 = vmatprep.subr.bf16.mxu0 0
    %1028 = vmatpush2.bf16.msra.mxu0 0
    %1029 = vmatprep.subr.bf16.mxu0 0
    %1030 = vmatpush2.bf16.msra.mxu0 0
    %1031 = vmatprep.subr.bf16.mxu0 0
    %1032 = vmatpush2.bf16.msra.mxu0 0
    %1033 = vmatprep.subr.bf16.mxu0 0
    %1034 = vmatpush2.bf16.msra.mxu0 0
    %1035 = vmatprep.subr.bf16.mxu0 0
    %1036 = vmatpush2.bf16.msra.mxu0 0
    %1037 = vmatprep.subr.bf16.mxu0 0
    %1038 = vmatpush2.bf16.msra.mxu0 0
    %1039 = vmatprep.subr.bf16.mxu0 0
    %1040 = vmatpush2.bf16.msra.mxu0 0
    %1041 = vmatprep.mubr.bf16.mxu0 0
    %1042 = vmatmul.mubr.bf16.gmra.mxu0 %v932
    %v1043 = vpop.f32.mrf.mxu0
    %v1044 = vadd.f32 %v960, %v1043
    %v1045 = vpop.f32.mrf.mxu0
    %v1046 = vpop.f32.mrf.mxu0
    %v1047 = vadd.f32 %v960, %v1046
    %v1048 = vpop.f32.mrf.mxu0
    %1049 = vmatprep.mubr.bf16.mxu0 0
    %1050 = vmatmul.mubr.bf16.gmra.mxu0 %v933
    %v1051 = vpop.f32.mrf.mxu0
    %v1052 = vadd.f32 %v960, %v1051
    %v1053 = vpop.f32.mrf.mxu0
    %v1054 = vpop.f32.mrf.mxu0
    %v1055 = vadd.f32 %v960, %v1054
    %v1056 = vpop.f32.mrf.mxu0
    %1057 = vmatprep.mubr.bf16.mxu0 0
    %1058 = vmatmul.mubr.bf16.gmra.mxu0 %v934
    %v1059 = vpop.f32.mrf.mxu0
    %v1060 = vadd.f32 %v960, %v1059
    %v1061 = vpop.f32.mrf.mxu0
    %v1062 = vpop.f32.mrf.mxu0
    %v1063 = vadd.f32 %v960, %v1062
    %v1064 = vpop.f32.mrf.mxu0
    %1065 = vmatprep.mubr.bf16.mxu0 0
    %1066 = vmatmul.mubr.bf16.gmra.mxu0 %v935
    %v1067 = vpop.f32.mrf.mxu0
    %v1068 = vadd.f32 %v960, %v1067
    %v1069 = vpop.f32.mrf.mxu0
    %v1070 = vpop.f32.mrf.mxu0
    %v1071 = vadd.f32 %v960, %v1070
    %v1072 = vpop.f32.mrf.mxu0
    %1073 = vmatprep.mubr.bf16.mxu0 0
    %1074 = vmatmul.mubr.bf16.gmra.mxu0 %v936
    %v1075 = vpop.f32.mrf.mxu0
    %v1076 = vadd.f32 %v960, %v1075
    %v1077 = vpop.f32.mrf.mxu0
    %v1078 = vpop.f32.mrf.mxu0
    %v1079 = vadd.f32 %v960, %v1078
    %v1080 = vpop.f32.mrf.mxu0
    %1081 = vmatprep.mubr.bf16.mxu0 0
    %1082 = vmatmul.mubr.bf16.gmra.mxu0 %v937
    %v1083 = vpop.f32.mrf.mxu0
    %v1084 = vadd.f32 %v960, %v1083
    %v1085 = vpop.f32.mrf.mxu0
    %v1086 = vpop.f32.mrf.mxu0
    %v1087 = vadd.f32 %v960, %v1086
    %v1088 = vpop.f32.mrf.mxu0
    %1089 = vmatprep.mubr.bf16.mxu0 0
    %1090 = vmatmul.mubr.bf16.gmra.mxu0 %v938
    %v1091 = vpop.f32.mrf.mxu0
    %v1092 = vadd.f32 %v960, %v1091
    %v1093 = vpop.f32.mrf.mxu0
    %v1094 = vpop.f32.mrf.mxu0
    %v1095 = vadd.f32 %v960, %v1094
    %v1096 = vpop.f32.mrf.mxu0
    %1097 = vmatprep.mubr.bf16.mxu0 0
    %1098 = vmatmul.mubr.bf16.gmra.mxu0 %v939
    %v1099 = vpop.f32.mrf.mxu0
    %v1100 = vadd.f32 %v960, %v1099
    %v1101 = vpop.f32.mrf.mxu0
    %v1102 = vpop.f32.mrf.mxu0
    %v1103 = vadd.f32 %v960, %v1102
    %v1104 = vpop.f32.mrf.mxu0
    %1105 = vdwg.mxu0
    %v1106 = vmax.f32 %v1044, 0.0
    %v1107 = vmax.f32 %v1047, 0.0
    %v1108 = vmax.f32 %v1052, 0.0
    %v1109 = vmax.f32 %v1055, 0.0
    %v1110 = vmax.f32 %v1060, 0.0
    %v1111 = vmax.f32 %v1063, 0.0
    %v1112 = vmax.f32 %v1068, 0.0
    %v1113 = vmax.f32 %v1071, 0.0
    %v1114 = vmax.f32 %v1076, 0.0
    %v1115 = vmax.f32 %v1079, 0.0
    %v1116 = vmax.f32 %v1084, 0.0
    %v1117 = vmax.f32 %v1087, 0.0
    %v1118 = vmax.f32 %v1092, 0.0
    %v1119 = vmax.f32 %v1095, 0.0
    %v1120 = vmax.f32 %v1100, 0.0
    %v1121 = vmax.f32 %v1103, 0.0
    %v1122 = vpack.c.bf16 %v1107, %v1106
    %v1123 = vpack.c.bf16 %v1109, %v1108
    %v1124 = vpack.c.bf16 %v1111, %v1110
    %v1125 = vpack.c.bf16 %v1113, %v1112
    %v1126 = vpack.c.bf16 %v1115, %v1114
    %v1127 = vpack.c.bf16 %v1117, %v1116
    %v1128 = vpack.c.bf16 %v1119, %v1118
    %v1129 = vpack.c.bf16 %v1121, %v1120
    %s1130 = scalar_lea.vmem [#allocation8], 64
    %v1131 = vld [vmem:[%s1130] sm:$0xf]
    %v1132 = vld [vmem:[%s1130 + $0x4] sm:$0xf]
    %v1133 = vld [vmem:[%s1130 + $0x8] sm:$0xf]
    %v1134 = vld [vmem:[%s1130 + $0xc] sm:$0xf]
    %v1135 = vld [vmem:[%s1130 + $0x10] sm:$0xf]
    %v1136 = vld [vmem:[%s1130 + $0x14] sm:$0xf]
    %v1137 = vld [vmem:[%s1130 + $0x18] sm:$0xf]
    %v1138 = vld [vmem:[%s1130 + $0x1c] sm:$0xf]
    %v1139 = vld [vmem:[%s1130 + $0x20] sm:$0xf]
    %v1140 = vld [vmem:[%s1130 + $0x24] sm:$0xf]
    %v1141 = vld [vmem:[%s1130 + $0x28] sm:$0xf]
    %v1142 = vld [vmem:[%s1130 + $0x2c] sm:$0xf]
    %v1143 = vld [vmem:[%s1130 + $0x30] sm:$0xf]
    %v1144 = vld [vmem:[%s1130 + $0x34] sm:$0xf]
    %v1145 = vld [vmem:[%s1130 + $0x38] sm:$0xf]
    %v1146 = vld [vmem:[%s1130 + $0x3c] sm:$0xf]
    %v1147 = vlaneseq
    %v1148 = vshrl.u32 %v1147, 7
    %v1149 = vsub.s32 1, %v1148
    %v1150 = vrot.slane %v931, %v1149
    %v1167 = vunpack.c.l.b16 %v1131
    %v1168 = vunpack.c.l.b16 %v1132
    %v1169 = vunpack.c.l.b16 %v1133
    %v1170 = vunpack.c.l.b16 %v1134
    %v1171 = vunpack.c.l.b16 %v1135
    %v1172 = vunpack.c.l.b16 %v1136
    %v1173 = vunpack.c.l.b16 %v1137
    %v1174 = vunpack.c.l.b16 %v1138
    %v1175 = vunpack.c.l.b16 %v1139
    %v1176 = vunpack.c.l.b16 %v1140
    %v1177 = vunpack.c.l.b16 %v1141
    %v1178 = vunpack.c.l.b16 %v1142
    %v1179 = vunpack.c.l.b16 %v1143
    %v1180 = vunpack.c.l.b16 %v1144
    %v1181 = vunpack.c.l.b16 %v1145
    %v1182 = vunpack.c.l.b16 %v1146
    %v1183 = vpack.c.b16 %v1168, %v1167
    %v1184 = vpack.c.b16 %v1170, %v1169
    %v1185 = vpack.c.b16 %v1172, %v1171
    %v1186 = vpack.c.b16 %v1174, %v1173
    %v1187 = vpack.c.b16 %v1176, %v1175
    %v1188 = vpack.c.b16 %v1178, %v1177
    %v1189 = vpack.c.b16 %v1180, %v1179
    %v1190 = vpack.c.b16 %v1182, %v1181
    %1199 = vmatprep.subr.bf16.mxu0 0
    %1200 = vmatpush1.bf16.msra.mxu0 %v1190
    %1201 = vmatprep.subr.bf16.mxu0 0
    %1202 = vmatpush1.bf16.msra.mxu0 %v1189
    %1203 = vmatprep.subr.bf16.mxu0 0
    %1204 = vmatpush1.bf16.msra.mxu0 %v1188
    %1205 = vmatprep.subr.bf16.mxu0 0
    %1206 = vmatpush1.bf16.msra.mxu0 %v1187
    %1207 = vmatprep.subr.bf16.mxu0 0
    %1208 = vmatpush1.bf16.msra.mxu0 %v1186
    %1209 = vmatprep.subr.bf16.mxu0 0
    %1210 = vmatpush1.bf16.msra.mxu0 %v1185
    %1211 = vmatprep.subr.bf16.mxu0 0
    %1212 = vmatpush1.bf16.msra.mxu0 %v1184
    %1213 = vmatprep.subr.bf16.mxu0 0
    %1214 = vmatpush1.bf16.msra.mxu0 %v1183
    %1215 = vmatprep.subr.bf16.mxu0 0
    %1216 = vmatpush2.bf16.msra.mxu0 0
    %1217 = vmatprep.subr.bf16.mxu0 0
    %1218 = vmatpush2.bf16.msra.mxu0 0
    %1219 = vmatprep.subr.bf16.mxu0 0
    %1220 = vmatpush2.bf16.msra.mxu0 0
    %1221 = vmatprep.subr.bf16.mxu0 0
    %1222 = vmatpush2.bf16.msra.mxu0 0
    %1223 = vmatprep.subr.bf16.mxu0 0
    %1224 = vmatpush2.bf16.msra.mxu0 0
    %1225 = vmatprep.subr.bf16.mxu0 0
    %1226 = vmatpush2.bf16.msra.mxu0 0
    %1227 = vmatprep.subr.bf16.mxu0 0
    %1228 = vmatpush2.bf16.msra.mxu0 0
    %1229 = vmatprep.subr.bf16.mxu0 0
    %1230 = vmatpush2.bf16.msra.mxu0 0
    %1231 = vmatprep.mubr.bf16.mxu0 0
    %1232 = vmatmul.mubr.bf16.gmra.mxu0 %v1122
    %v1233 = vpop.f32.mrf.mxu0
    %v1234 = vadd.f32 %v1150, %v1233
    %v1235 = vpop.f32.mrf.mxu0
    %v1236 = vpop.f32.mrf.mxu0
    %v1237 = vadd.f32 %v1150, %v1236
    %v1238 = vpop.f32.mrf.mxu0
    %1239 = vmatprep.mubr.bf16.mxu0 0
    %1240 = vmatmul.mubr.bf16.gmra.mxu0 %v1123
    %v1241 = vpop.f32.mrf.mxu0
    %v1242 = vadd.f32 %v1150, %v1241
    %v1243 = vpop.f32.mrf.mxu0
    %v1244 = vpop.f32.mrf.mxu0
    %v1245 = vadd.f32 %v1150, %v1244
    %v1246 = vpop.f32.mrf.mxu0
    %1247 = vmatprep.mubr.bf16.mxu0 0
    %1248 = vmatmul.mubr.bf16.gmra.mxu0 %v1124
    %v1249 = vpop.f32.mrf.mxu0
    %v1250 = vadd.f32 %v1150, %v1249
    %v1251 = vpop.f32.mrf.mxu0
    %v1252 = vpop.f32.mrf.mxu0
    %v1253 = vadd.f32 %v1150, %v1252
    %v1254 = vpop.f32.mrf.mxu0
    %1255 = vmatprep.mubr.bf16.mxu0 0
    %1256 = vmatmul.mubr.bf16.gmra.mxu0 %v1125
    %v1257 = vpop.f32.mrf.mxu0
    %v1258 = vadd.f32 %v1150, %v1257
    %v1259 = vpop.f32.mrf.mxu0
    %v1260 = vpop.f32.mrf.mxu0
    %v1261 = vadd.f32 %v1150, %v1260
    %v1262 = vpop.f32.mrf.mxu0
    %1263 = vmatprep.mubr.bf16.mxu0 0
    %1264 = vmatmul.mubr.bf16.gmra.mxu0 %v1126
    %v1265 = vpop.f32.mrf.mxu0
    %v1266 = vadd.f32 %v1150, %v1265
    %v1267 = vpop.f32.mrf.mxu0
    %v1268 = vpop.f32.mrf.mxu0
    %v1269 = vadd.f32 %v1150, %v1268
    %v1270 = vpop.f32.mrf.mxu0
    %1271 = vmatprep.mubr.bf16.mxu0 0
    %1272 = vmatmul.mubr.bf16.gmra.mxu0 %v1127
    %v1273 = vpop.f32.mrf.mxu0
    %v1274 = vadd.f32 %v1150, %v1273
    %v1275 = vpop.f32.mrf.mxu0
    %v1276 = vpop.f32.mrf.mxu0
    %v1277 = vadd.f32 %v1150, %v1276
    %v1278 = vpop.f32.mrf.mxu0
    %1279 = vmatprep.mubr.bf16.mxu0 0
    %1280 = vmatmul.mubr.bf16.gmra.mxu0 %v1128
    %v1281 = vpop.f32.mrf.mxu0
    %v1282 = vadd.f32 %v1150, %v1281
    %v1283 = vpop.f32.mrf.mxu0
    %v1284 = vpop.f32.mrf.mxu0
    %v1285 = vadd.f32 %v1150, %v1284
    %v1286 = vpop.f32.mrf.mxu0
    %1287 = vmatprep.mubr.bf16.mxu0 0
    %1288 = vmatmul.mubr.bf16.gmra.mxu0 %v1129
    %v1289 = vpop.f32.mrf.mxu0
    %v1290 = vadd.f32 %v1150, %v1289
    %v1291 = vpop.f32.mrf.mxu0
    %v1292 = vpop.f32.mrf.mxu0
    %v1293 = vadd.f32 %v1150, %v1292
    %v1294 = vpop.f32.mrf.mxu0
    %1295 = vdwg.mxu0
    %v1296 = vmax.f32 %v1234, 0.0
    %v1297 = vmax.f32 %v1237, 0.0
    %v1298 = vmax.f32 %v1242, 0.0
    %v1299 = vmax.f32 %v1245, 0.0
    %v1300 = vmax.f32 %v1250, 0.0
    %v1301 = vmax.f32 %v1253, 0.0
    %v1302 = vmax.f32 %v1258, 0.0
    %v1303 = vmax.f32 %v1261, 0.0
    %v1304 = vmax.f32 %v1266, 0.0
    %v1305 = vmax.f32 %v1269, 0.0
    %v1306 = vmax.f32 %v1274, 0.0
    %v1307 = vmax.f32 %v1277, 0.0
    %v1308 = vmax.f32 %v1282, 0.0
    %v1309 = vmax.f32 %v1285, 0.0
    %v1310 = vmax.f32 %v1290, 0.0
    %v1311 = vmax.f32 %v1293, 0.0
    %v1312 = vlaneseq
    %v1313 = vshrl.u32 %v1312, 7
    %v1314 = vsub.s32 2, %v1313
    %v1315 = vrot.slane %v931, %v1314
    %v1316 = vmul.f32 %v1296, %v1315
    %v1317 = vmul.f32 %v1297, %v1315
    %v1318 = vmul.f32 %v1298, %v1315
    %v1319 = vmul.f32 %v1299, %v1315
    %v1320 = vmul.f32 %v1300, %v1315
    %v1321 = vmul.f32 %v1301, %v1315
    %v1322 = vmul.f32 %v1302, %v1315
    %v1323 = vmul.f32 %v1303, %v1315
    %v1324 = vmul.f32 %v1304, %v1315
    %v1325 = vmul.f32 %v1305, %v1315
    %v1326 = vmul.f32 %v1306, %v1315
    %v1327 = vmul.f32 %v1307, %v1315
    %v1328 = vmul.f32 %v1308, %v1315
    %v1329 = vmul.f32 %v1309, %v1315
    %v1330 = vmul.f32 %v1310, %v1315
    %v1331 = vmul.f32 %v1311, %v1315
    %v1332 = vlaneseq
    %v1333 = vshrl.u32 %v1332, 7
    %v1334 = vsub.s32 3, %v1333
    %v1335 = vrot.slane %v931, %v1334
    %v1336 = vadd.f32 %v1316, %v1335
    %v1337 = vadd.f32 %v1317, %v1335
    %v1338 = vadd.f32 %v1318, %v1335
    %v1339 = vadd.f32 %v1319, %v1335
    %v1340 = vadd.f32 %v1320, %v1335
    %v1341 = vadd.f32 %v1321, %v1335
    %v1342 = vadd.f32 %v1322, %v1335
    %v1343 = vadd.f32 %v1323, %v1335
    %v1344 = vadd.f32 %v1324, %v1335
    %v1345 = vadd.f32 %v1325, %v1335
    %v1346 = vadd.f32 %v1326, %v1335
    %v1347 = vadd.f32 %v1327, %v1335
    %v1348 = vadd.f32 %v1328, %v1335
    %v1349 = vadd.f32 %v1329, %v1335
    %v1350 = vadd.f32 %v1330, %v1335
    %v1351 = vadd.f32 %v1331, %v1335
    %v1352 = vpack.c.bf16 %v1337, %v1336
    %v1353 = vpack.c.bf16 %v1339, %v1338
    %v1354 = vpack.c.bf16 %v1341, %v1340
    %v1355 = vpack.c.bf16 %v1343, %v1342
    %v1356 = vpack.c.bf16 %v1345, %v1344
    %v1357 = vpack.c.bf16 %v1347, %v1346
    %v1358 = vpack.c.bf16 %v1349, %v1348
    %v1359 = vpack.c.bf16 %v1351, %v1350
    %1360 = vmatprep.subr.bf16.mxu0 0
    %1361 = vmatpush1.bf16.msra.mxu0 %v1359
    %1362 = vmatprep.subr.bf16.mxu0 0
    %1363 = vmatpush1.bf16.msra.mxu0 %v1358
    %1364 = vmatprep.subr.bf16.mxu0 0
    %1365 = vmatpush1.bf16.msra.mxu0 %v1357
    %1366 = vmatprep.subr.bf16.mxu0 0
    %1367 = vmatpush1.bf16.msra.mxu0 %v1356
    %1368 = vmatprep.subr.bf16.mxu0 0
    %1369 = vmatpush1.bf16.msra.mxu0 %v1355
    %1370 = vmatprep.subr.bf16.mxu0 0
    %1371 = vmatpush1.bf16.msra.mxu0 %v1354
    %1372 = vmatprep.subr.bf16.mxu0 0
    %1373 = vmatpush1.bf16.msra.mxu0 %v1353
    %1374 = vmatprep.subr.bf16.mxu0 0
    %1375 = vmatpush1.bf16.msra.mxu0 %v1352
    %1376 = vmatprep.subr.bf16.mxu0 0
    %1377 = vmatpush2.bf16.msra.mxu0 0
    %1378 = vmatprep.subr.bf16.mxu0 0
    %1379 = vmatpush2.bf16.msra.mxu0 0
    %1380 = vmatprep.subr.bf16.mxu0 0
    %1381 = vmatpush2.bf16.msra.mxu0 0
    %1382 = vmatprep.subr.bf16.mxu0 0
    %1383 = vmatpush2.bf16.msra.mxu0 0
    %1384 = vmatprep.subr.bf16.mxu0 0
    %1385 = vmatpush2.bf16.msra.mxu0 0
    %1386 = vmatprep.subr.bf16.mxu0 0
    %1387 = vmatpush2.bf16.msra.mxu0 0
    %1388 = vmatprep.subr.bf16.mxu0 0
    %1389 = vmatpush2.bf16.msra.mxu0 0
    %1390 = vmatprep.subr.bf16.mxu0 0
    %1391 = vmatpush2.bf16.msra.mxu0 0
    %1392 = vmatprep.mubr.bf16.mxu0 0
    %1393 = vmatmul.mubr.bf16.gmra.mxu0 %v775
    %v1394 = vpop.f32.mrf.mxu0
    %v1395 = vadd.f32 0.0, %v1394
    %v1396 = vpop.f32.mrf.mxu0
    %v1397 = vpop.f32.mrf.mxu0
    %v1398 = vpop.f32.mrf.mxu0
    %1399 = vdwg.mxu0
    %v1400 = vpack.c.bf16 %v1395, %v1395
    %s1401 = scalar_lea.vmem [#allocation11], 64
    %v1402 = vld [vmem:[%s1401] sm:$0xf]
    %v1403 = vld [vmem:[%s1401 + $0x4] sm:$0xf]
    %v1404 = vld [vmem:[%s1401 + $0x8] sm:$0xf]
    %v1405 = vld [vmem:[%s1401 + $0xc] sm:$0xf]
    %v1406 = vld [vmem:[%s1401 + $0x10] sm:$0xf]
    %v1407 = vld [vmem:[%s1401 + $0x14] sm:$0xf]
    %v1408 = vld [vmem:[%s1401 + $0x18] sm:$0xf]
    %v1409 = vld [vmem:[%s1401 + $0x1c] sm:$0xf]
    %v1410 = vld [vmem:[%s1401 + $0x20] sm:$0xf]
    %v1411 = vld [vmem:[%s1401 + $0x24] sm:$0xf]
    %v1412 = vld [vmem:[%s1401 + $0x28] sm:$0xf]
    %v1413 = vld [vmem:[%s1401 + $0x2c] sm:$0xf]
    %v1414 = vld [vmem:[%s1401 + $0x30] sm:$0xf]
    %v1415 = vld [vmem:[%s1401 + $0x34] sm:$0xf]
    %v1416 = vld [vmem:[%s1401 + $0x38] sm:$0xf]
    %v1417 = vld [vmem:[%s1401 + $0x3c] sm:$0xf]
    %v1434 = vunpack.c.l.b16 %v1402
    %v1435 = vunpack.c.l.b16 %v1403
    %v1436 = vunpack.c.l.b16 %v1404
    %v1437 = vunpack.c.l.b16 %v1405
    %v1438 = vunpack.c.l.b16 %v1406
    %v1439 = vunpack.c.l.b16 %v1407
    %v1440 = vunpack.c.l.b16 %v1408
    %v1441 = vunpack.c.l.b16 %v1409
    %v1442 = vunpack.c.l.b16 %v1410
    %v1443 = vunpack.c.l.b16 %v1411
    %v1444 = vunpack.c.l.b16 %v1412
    %v1445 = vunpack.c.l.b16 %v1413
    %v1446 = vunpack.c.l.b16 %v1414
    %v1447 = vunpack.c.l.b16 %v1415
    %v1448 = vunpack.c.l.b16 %v1416
    %v1449 = vunpack.c.l.b16 %v1417
    %v1450 = vpack.c.b16 %v1435, %v1434
    %v1451 = vpack.c.b16 %v1437, %v1436
    %v1452 = vpack.c.b16 %v1439, %v1438
    %v1453 = vpack.c.b16 %v1441, %v1440
    %v1454 = vpack.c.b16 %v1443, %v1442
    %v1455 = vpack.c.b16 %v1445, %v1444
    %v1456 = vpack.c.b16 %v1447, %v1446
    %v1457 = vpack.c.b16 %v1449, %v1448
    %1466 = vmatprep.subr.bf16.mxu0 0
    %1467 = vmatpush1.bf16.msra.mxu0 %v1457
    %1468 = vmatprep.subr.bf16.mxu0 0
    %1469 = vmatpush1.bf16.msra.mxu0 %v1456
    %1470 = vmatprep.subr.bf16.mxu0 0
    %1471 = vmatpush1.bf16.msra.mxu0 %v1455
    %1472 = vmatprep.subr.bf16.mxu0 0
    %1473 = vmatpush1.bf16.msra.mxu0 %v1454
    %1474 = vmatprep.subr.bf16.mxu0 0
    %1475 = vmatpush1.bf16.msra.mxu0 %v1453
    %1476 = vmatprep.subr.bf16.mxu0 0
    %1477 = vmatpush1.bf16.msra.mxu0 %v1452
    %1478 = vmatprep.subr.bf16.mxu0 0
    %1479 = vmatpush1.bf16.msra.mxu0 %v1451
    %1480 = vmatprep.subr.bf16.mxu0 0
    %1481 = vmatpush1.bf16.msra.mxu0 %v1450
    %1482 = vmatprep.subr.bf16.mxu0 0
    %1483 = vmatpush2.bf16.msra.mxu0 0
    %1484 = vmatprep.subr.bf16.mxu0 0
    %1485 = vmatpush2.bf16.msra.mxu0 0
    %1486 = vmatprep.subr.bf16.mxu0 0
    %1487 = vmatpush2.bf16.msra.mxu0 0
    %1488 = vmatprep.subr.bf16.mxu0 0
    %1489 = vmatpush2.bf16.msra.mxu0 0
    %1490 = vmatprep.subr.bf16.mxu0 0
    %1491 = vmatpush2.bf16.msra.mxu0 0
    %1492 = vmatprep.subr.bf16.mxu0 0
    %1493 = vmatpush2.bf16.msra.mxu0 0
    %1494 = vmatprep.subr.bf16.mxu0 0
    %1495 = vmatpush2.bf16.msra.mxu0 0
    %1496 = vmatprep.subr.bf16.mxu0 0
    %1497 = vmatpush2.bf16.msra.mxu0 0
    %1498 = vmatprep.mubr.bf16.mxu0 0
    %1499 = vmatmul.mubr.bf16.gmra.mxu0 %v1400
    %v1500 = vpop.f32.mrf.mxu0
    %v1501 = vadd.f32 0.0, %v1500
    %v1502 = vpop.f32.mrf.mxu0
    %v1503 = vpop.f32.mrf.mxu0
    %v1504 = vpop.f32.mrf.mxu0
    %1505 = vdwg.mxu0
    %v1522 = vunpack.c.l.b16 %v817
    %v1523 = vunpack.c.l.b16 %v818
    %v1524 = vunpack.c.l.b16 %v819
    %v1525 = vunpack.c.l.b16 %v820
    %v1526 = vunpack.c.l.b16 %v821
    %v1527 = vunpack.c.l.b16 %v822
    %v1528 = vunpack.c.l.b16 %v823
    %v1529 = vunpack.c.l.b16 %v824
    %v1530 = vunpack.c.l.b16 %v825
    %v1531 = vunpack.c.l.b16 %v826
    %v1532 = vunpack.c.l.b16 %v827
    %v1533 = vunpack.c.l.b16 %v828
    %v1534 = vunpack.c.l.b16 %v829
    %v1535 = vunpack.c.l.b16 %v830
    %v1536 = vunpack.c.l.b16 %v831
    %v1537 = vunpack.c.l.b16 %v832
    %v1538 = vpack.c.b16 %v1523, %v1522
    %v1539 = vpack.c.b16 %v1525, %v1524
    %v1540 = vpack.c.b16 %v1527, %v1526
    %v1541 = vpack.c.b16 %v1529, %v1528
    %v1542 = vpack.c.b16 %v1531, %v1530
    %v1543 = vpack.c.b16 %v1533, %v1532
    %v1544 = vpack.c.b16 %v1535, %v1534
    %v1545 = vpack.c.b16 %v1537, %v1536
    %1554 = vmatprep.subr.bf16.mxu0 0
    %1555 = vmatpush1.bf16.msra.mxu0 %v1545
    %1556 = vmatprep.subr.bf16.mxu0 0
    %1557 = vmatpush1.bf16.msra.mxu0 %v1544
    %1558 = vmatprep.subr.bf16.mxu0 0
    %1559 = vmatpush1.bf16.msra.mxu0 %v1543
    %1560 = vmatprep.subr.bf16.mxu0 0
    %1561 = vmatpush1.bf16.msra.mxu0 %v1542
    %1562 = vmatprep.subr.bf16.mxu0 0
    %1563 = vmatpush1.bf16.msra.mxu0 %v1541
    %1564 = vmatprep.subr.bf16.mxu0 0
    %1565 = vmatpush1.bf16.msra.mxu0 %v1540
    %1566 = vmatprep.subr.bf16.mxu0 0
    %1567 = vmatpush1.bf16.msra.mxu0 %v1539
    %1568 = vmatprep.subr.bf16.mxu0 0
    %1569 = vmatpush1.bf16.msra.mxu0 %v1538
    %1570 = vmatprep.subr.bf16.mxu0 0
    %1571 = vmatpush2.bf16.msra.mxu0 0
    %1572 = vmatprep.subr.bf16.mxu0 0
    %1573 = vmatpush2.bf16.msra.mxu0 0
    %1574 = vmatprep.subr.bf16.mxu0 0
    %1575 = vmatpush2.bf16.msra.mxu0 0
    %1576 = vmatprep.subr.bf16.mxu0 0
    %1577 = vmatpush2.bf16.msra.mxu0 0
    %1578 = vmatprep.subr.bf16.mxu0 0
    %1579 = vmatpush2.bf16.msra.mxu0 0
    %1580 = vmatprep.subr.bf16.mxu0 0
    %1581 = vmatpush2.bf16.msra.mxu0 0
    %1582 = vmatprep.subr.bf16.mxu0 0
    %1583 = vmatpush2.bf16.msra.mxu0 0
    %1584 = vmatprep.subr.bf16.mxu0 0
    %1585 = vmatpush2.bf16.msra.mxu0 0
    %1586 = vmatprep.mubr.bf16.mxu0 0
    %1587 = vmatmul.mubr.bf16.gmra.mxu0 %v816
    %v1588 = vpop.f32.mrf.mxu0
    %v1589 = vadd.f32 %v1501, %v1588
    %v1590 = vpop.f32.mrf.mxu0
    %v1591 = vpop.f32.mrf.mxu0
    %v1592 = vpop.f32.mrf.mxu0
    %1593 = vdwg.mxu0
    %1594 = vmatprep.subr.bf16.mxu0 0
    %1595 = vmatpush1.bf16.msra.mxu0 %v1359
    %1596 = vmatprep.subr.bf16.mxu0 0
    %1597 = vmatpush1.bf16.msra.mxu0 %v1358
    %1598 = vmatprep.subr.bf16.mxu0 0
    %1599 = vmatpush1.bf16.msra.mxu0 %v1357
    %1600 = vmatprep.subr.bf16.mxu0 0
    %1601 = vmatpush1.bf16.msra.mxu0 %v1356
    %1602 = vmatprep.subr.bf16.mxu0 0
    %1603 = vmatpush1.bf16.msra.mxu0 %v1355
    %1604 = vmatprep.subr.bf16.mxu0 0
    %1605 = vmatpush1.bf16.msra.mxu0 %v1354
    %1606 = vmatprep.subr.bf16.mxu0 0
    %1607 = vmatpush1.bf16.msra.mxu0 %v1353
    %1608 = vmatprep.subr.bf16.mxu0 0
    %1609 = vmatpush1.bf16.msra.mxu0 %v1352
    %1610 = vmatprep.subr.bf16.mxu0 0
    %1611 = vmatpush2.bf16.msra.mxu0 0
    %1612 = vmatprep.subr.bf16.mxu0 0
    %1613 = vmatpush2.bf16.msra.mxu0 0
    %1614 = vmatprep.subr.bf16.mxu0 0
    %1615 = vmatpush2.bf16.msra.mxu0 0
    %1616 = vmatprep.subr.bf16.mxu0 0
    %1617 = vmatpush2.bf16.msra.mxu0 0
    %1618 = vmatprep.subr.bf16.mxu0 0
    %1619 = vmatpush2.bf16.msra.mxu0 0
    %1620 = vmatprep.subr.bf16.mxu0 0
    %1621 = vmatpush2.bf16.msra.mxu0 0
    %1622 = vmatprep.subr.bf16.mxu0 0
    %1623 = vmatpush2.bf16.msra.mxu0 0
    %1624 = vmatprep.subr.bf16.mxu0 0
    %1625 = vmatpush2.bf16.msra.mxu0 0
    %1626 = vmatprep.mubr.bf16.mxu0 0
    %1627 = vmatmul.mubr.bf16.gmra.mxu0 %v187
    %v1628 = vpop.f32.mrf.mxu0
    %v1629 = vadd.f32 0.0, %v1628
    %v1630 = vpop.f32.mrf.mxu0
    %v1631 = vpop.f32.mrf.mxu0
    %v1632 = vadd.f32 0.0, %v1631
    %v1633 = vpop.f32.mrf.mxu0
    %1634 = vmatprep.mubr.bf16.mxu0 0
    %1635 = vmatmul.mubr.bf16.gmra.mxu0 %v188
    %v1636 = vpop.f32.mrf.mxu0
    %v1637 = vadd.f32 0.0, %v1636
    %v1638 = vpop.f32.mrf.mxu0
    %v1639 = vpop.f32.mrf.mxu0
    %v1640 = vadd.f32 0.0, %v1639
    %v1641 = vpop.f32.mrf.mxu0
    %1642 = vmatprep.mubr.bf16.mxu0 0
    %1643 = vmatmul.mubr.bf16.gmra.mxu0 %v189
    %v1644 = vpop.f32.mrf.mxu0
    %v1645 = vadd.f32 0.0, %v1644
    %v1646 = vpop.f32.mrf.mxu0
    %v1647 = vpop.f32.mrf.mxu0
    %v1648 = vadd.f32 0.0, %v1647
    %v1649 = vpop.f32.mrf.mxu0
    %1650 = vmatprep.mubr.bf16.mxu0 0
    %1651 = vmatmul.mubr.bf16.gmra.mxu0 %v190
    %v1652 = vpop.f32.mrf.mxu0
    %v1653 = vadd.f32 0.0, %v1652
    %v1654 = vpop.f32.mrf.mxu0
    %v1655 = vpop.f32.mrf.mxu0
    %v1656 = vadd.f32 0.0, %v1655
    %v1657 = vpop.f32.mrf.mxu0
    %1658 = vmatprep.mubr.bf16.mxu0 0
    %1659 = vmatmul.mubr.bf16.gmra.mxu0 %v191
    %v1660 = vpop.f32.mrf.mxu0
    %v1661 = vadd.f32 0.0, %v1660
    %v1662 = vpop.f32.mrf.mxu0
    %v1663 = vpop.f32.mrf.mxu0
    %v1664 = vadd.f32 0.0, %v1663
    %v1665 = vpop.f32.mrf.mxu0
    %1666 = vmatprep.mubr.bf16.mxu0 0
    %1667 = vmatmul.mubr.bf16.gmra.mxu0 %v192
    %v1668 = vpop.f32.mrf.mxu0
    %v1669 = vadd.f32 0.0, %v1668
    %v1670 = vpop.f32.mrf.mxu0
    %v1671 = vpop.f32.mrf.mxu0
    %v1672 = vadd.f32 0.0, %v1671
    %v1673 = vpop.f32.mrf.mxu0
    %1674 = vmatprep.mubr.bf16.mxu0 0
    %1675 = vmatmul.mubr.bf16.gmra.mxu0 %v193
    %v1676 = vpop.f32.mrf.mxu0
    %v1677 = vadd.f32 0.0, %v1676
    %v1678 = vpop.f32.mrf.mxu0
    %v1679 = vpop.f32.mrf.mxu0
    %v1680 = vadd.f32 0.0, %v1679
    %v1681 = vpop.f32.mrf.mxu0
    %1682 = vmatprep.mubr.bf16.mxu0 0
    %1683 = vmatmul.mubr.bf16.gmra.mxu0 %v194
    %v1684 = vpop.f32.mrf.mxu0
    %v1685 = vadd.f32 0.0, %v1684
    %v1686 = vpop.f32.mrf.mxu0
    %v1687 = vpop.f32.mrf.mxu0
    %v1688 = vadd.f32 0.0, %v1687
    %v1689 = vpop.f32.mrf.mxu0
    %1690 = vdwg.mxu0
    %s1691 = scalar_lea.vmem [#allocation10], 16
    %v1692 = vld [vmem:[%s1691] sm:$0xff]
    %v1693 = vpack.c.bf16 %v1632, %v1629
    %v1694 = vpack.c.bf16 %v1640, %v1637
    %v1695 = vpack.c.bf16 %v1648, %v1645
    %v1696 = vpack.c.bf16 %v1656, %v1653
    %v1697 = vpack.c.bf16 %v1664, %v1661
    %v1698 = vpack.c.bf16 %v1672, %v1669
    %v1699 = vpack.c.bf16 %v1680, %v1677
    %v1700 = vpack.c.bf16 %v1688, %v1685
    %s1701 = scalar_lea.vmem [#allocation7], 128
    %v1702 = vld [vmem:[%s1701] sm:$0xf]
    %v1703 = vld [vmem:[%s1701 + $0x4] sm:$0xf]
    %v1704 = vld [vmem:[%s1701 + $0x8] sm:$0xf]
    %v1705 = vld [vmem:[%s1701 + $0xc] sm:$0xf]
    %v1706 = vld [vmem:[%s1701 + $0x10] sm:$0xf]
    %v1707 = vld [vmem:[%s1701 + $0x14] sm:$0xf]
    %v1708 = vld [vmem:[%s1701 + $0x18] sm:$0xf]
    %v1709 = vld [vmem:[%s1701 + $0x1c] sm:$0xf]
    %v1710 = vld [vmem:[%s1701 + $0x20] sm:$0xf]
    %v1711 = vld [vmem:[%s1701 + $0x24] sm:$0xf]
    %v1712 = vld [vmem:[%s1701 + $0x28] sm:$0xf]
    %v1713 = vld [vmem:[%s1701 + $0x2c] sm:$0xf]
    %v1714 = vld [vmem:[%s1701 + $0x30] sm:$0xf]
    %v1715 = vld [vmem:[%s1701 + $0x34] sm:$0xf]
    %v1716 = vld [vmem:[%s1701 + $0x38] sm:$0xf]
    %v1717 = vld [vmem:[%s1701 + $0x3c] sm:$0xf]
    %v1718 = vlaneseq
    %v1719 = vshrl.u32 %v1718, 7
    %v1720 = vsub.s32 0, %v1719
    %v1721 = vrot.slane %v1692, %v1720
    %v1738 = vunpack.c.l.b16 %v1702
    %v1739 = vunpack.c.l.b16 %v1703
    %v1740 = vunpack.c.l.b16 %v1704
    %v1741 = vunpack.c.l.b16 %v1705
    %v1742 = vunpack.c.l.b16 %v1706
    %v1743 = vunpack.c.l.b16 %v1707
    %v1744 = vunpack.c.l.b16 %v1708
    %v1745 = vunpack.c.l.b16 %v1709
    %v1746 = vunpack.c.l.b16 %v1710
    %v1747 = vunpack.c.l.b16 %v1711
    %v1748 = vunpack.c.l.b16 %v1712
    %v1749 = vunpack.c.l.b16 %v1713
    %v1750 = vunpack.c.l.b16 %v1714
    %v1751 = vunpack.c.l.b16 %v1715
    %v1752 = vunpack.c.l.b16 %v1716
    %v1753 = vunpack.c.l.b16 %v1717
    %v1754 = vpack.c.b16 %v1739, %v1738
    %v1755 = vpack.c.b16 %v1741, %v1740
    %v1756 = vpack.c.b16 %v1743, %v1742
    %v1757 = vpack.c.b16 %v1745, %v1744
    %v1758 = vpack.c.b16 %v1747, %v1746
    %v1759 = vpack.c.b16 %v1749, %v1748
    %v1760 = vpack.c.b16 %v1751, %v1750
    %v1761 = vpack.c.b16 %v1753, %v1752
    %1770 = vmatprep.subr.bf16.mxu0 0
    %1771 = vmatpush1.bf16.msra.mxu0 %v1761
    %1772 = vmatprep.subr.bf16.mxu0 0
    %1773 = vmatpush1.bf16.msra.mxu0 %v1760
    %1774 = vmatprep.subr.bf16.mxu0 0
    %1775 = vmatpush1.bf16.msra.mxu0 %v1759
    %1776 = vmatprep.subr.bf16.mxu0 0
    %1777 = vmatpush1.bf16.msra.mxu0 %v1758
    %1778 = vmatprep.subr.bf16.mxu0 0
    %1779 = vmatpush1.bf16.msra.mxu0 %v1757
    %1780 = vmatprep.subr.bf16.mxu0 0
    %1781 = vmatpush1.bf16.msra.mxu0 %v1756
    %1782 = vmatprep.subr.bf16.mxu0 0
    %1783 = vmatpush1.bf16.msra.mxu0 %v1755
    %1784 = vmatprep.subr.bf16.mxu0 0
    %1785 = vmatpush1.bf16.msra.mxu0 %v1754
    %1786 = vmatprep.subr.bf16.mxu0 0
    %1787 = vmatpush2.bf16.msra.mxu0 0
    %1788 = vmatprep.subr.bf16.mxu0 0
    %1789 = vmatpush2.bf16.msra.mxu0 0
    %1790 = vmatprep.subr.bf16.mxu0 0
    %1791 = vmatpush2.bf16.msra.mxu0 0
    %1792 = vmatprep.subr.bf16.mxu0 0
    %1793 = vmatpush2.bf16.msra.mxu0 0
    %1794 = vmatprep.subr.bf16.mxu0 0
    %1795 = vmatpush2.bf16.msra.mxu0 0
    %1796 = vmatprep.subr.bf16.mxu0 0
    %1797 = vmatpush2.bf16.msra.mxu0 0
    %1798 = vmatprep.subr.bf16.mxu0 0
    %1799 = vmatpush2.bf16.msra.mxu0 0
    %1800 = vmatprep.subr.bf16.mxu0 0
    %1801 = vmatpush2.bf16.msra.mxu0 0
    %1802 = vmatprep.mubr.bf16.mxu0 0
    %1803 = vmatmul.mubr.bf16.gmra.mxu0 %v1693
    %v1804 = vpop.f32.mrf.mxu0
    %v1805 = vadd.f32 %v1721, %v1804
    %v1806 = vpop.f32.mrf.mxu0
    %v1807 = vpop.f32.mrf.mxu0
    %v1808 = vadd.f32 %v1721, %v1807
    %v1809 = vpop.f32.mrf.mxu0
    %1810 = vmatprep.mubr.bf16.mxu0 0
    %1811 = vmatmul.mubr.bf16.gmra.mxu0 %v1694
    %v1812 = vpop.f32.mrf.mxu0
    %v1813 = vadd.f32 %v1721, %v1812
    %v1814 = vpop.f32.mrf.mxu0
    %v1815 = vpop.f32.mrf.mxu0
    %v1816 = vadd.f32 %v1721, %v1815
    %v1817 = vpop.f32.mrf.mxu0
    %1818 = vmatprep.mubr.bf16.mxu0 0
    %1819 = vmatmul.mubr.bf16.gmra.mxu0 %v1695
    %v1820 = vpop.f32.mrf.mxu0
    %v1821 = vadd.f32 %v1721, %v1820
    %v1822 = vpop.f32.mrf.mxu0
    %v1823 = vpop.f32.mrf.mxu0
    %v1824 = vadd.f32 %v1721, %v1823
    %v1825 = vpop.f32.mrf.mxu0
    %1826 = vmatprep.mubr.bf16.mxu0 0
    %1827 = vmatmul.mubr.bf16.gmra.mxu0 %v1696
    %v1828 = vpop.f32.mrf.mxu0
    %v1829 = vadd.f32 %v1721, %v1828
    %v1830 = vpop.f32.mrf.mxu0
    %v1831 = vpop.f32.mrf.mxu0
    %v1832 = vadd.f32 %v1721, %v1831
    %v1833 = vpop.f32.mrf.mxu0
    %1834 = vmatprep.mubr.bf16.mxu0 0
    %1835 = vmatmul.mubr.bf16.gmra.mxu0 %v1697
    %v1836 = vpop.f32.mrf.mxu0
    %v1837 = vadd.f32 %v1721, %v1836
    %v1838 = vpop.f32.mrf.mxu0
    %v1839 = vpop.f32.mrf.mxu0
    %v1840 = vadd.f32 %v1721, %v1839
    %v1841 = vpop.f32.mrf.mxu0
    %1842 = vmatprep.mubr.bf16.mxu0 0
    %1843 = vmatmul.mubr.bf16.gmra.mxu0 %v1698
    %v1844 = vpop.f32.mrf.mxu0
    %v1845 = vadd.f32 %v1721, %v1844
    %v1846 = vpop.f32.mrf.mxu0
    %v1847 = vpop.f32.mrf.mxu0
    %v1848 = vadd.f32 %v1721, %v1847
    %v1849 = vpop.f32.mrf.mxu0
    %1850 = vmatprep.mubr.bf16.mxu0 0
    %1851 = vmatmul.mubr.bf16.gmra.mxu0 %v1699
    %v1852 = vpop.f32.mrf.mxu0
    %v1853 = vadd.f32 %v1721, %v1852
    %v1854 = vpop.f32.mrf.mxu0
    %v1855 = vpop.f32.mrf.mxu0
    %v1856 = vadd.f32 %v1721, %v1855
    %v1857 = vpop.f32.mrf.mxu0
    %1858 = vmatprep.mubr.bf16.mxu0 0
    %1859 = vmatmul.mubr.bf16.gmra.mxu0 %v1700
    %v1860 = vpop.f32.mrf.mxu0
    %v1861 = vadd.f32 %v1721, %v1860
    %v1862 = vpop.f32.mrf.mxu0
    %v1863 = vpop.f32.mrf.mxu0
    %v1864 = vadd.f32 %v1721, %v1863
    %v1865 = vpop.f32.mrf.mxu0
    %1866 = vdwg.mxu0
    %v1867 = vmax.f32 %v1805, 0.0
    %v1868 = vmax.f32 %v1808, 0.0
    %v1869 = vmax.f32 %v1813, 0.0
    %v1870 = vmax.f32 %v1816, 0.0
    %v1871 = vmax.f32 %v1821, 0.0
    %v1872 = vmax.f32 %v1824, 0.0
    %v1873 = vmax.f32 %v1829, 0.0
    %v1874 = vmax.f32 %v1832, 0.0
    %v1875 = vmax.f32 %v1837, 0.0
    %v1876 = vmax.f32 %v1840, 0.0
    %v1877 = vmax.f32 %v1845, 0.0
    %v1878 = vmax.f32 %v1848, 0.0
    %v1879 = vmax.f32 %v1853, 0.0
    %v1880 = vmax.f32 %v1856, 0.0
    %v1881 = vmax.f32 %v1861, 0.0
    %v1882 = vmax.f32 %v1864, 0.0
    %v1883 = vpack.c.bf16 %v1868, %v1867
    %v1884 = vpack.c.bf16 %v1870, %v1869
    %v1885 = vpack.c.bf16 %v1872, %v1871
    %v1886 = vpack.c.bf16 %v1874, %v1873
    %v1887 = vpack.c.bf16 %v1876, %v1875
    %v1888 = vpack.c.bf16 %v1878, %v1877
    %v1889 = vpack.c.bf16 %v1880, %v1879
    %v1890 = vpack.c.bf16 %v1882, %v1881
    %s1891 = scalar_lea.vmem [#allocation8], 128
    %v1892 = vld [vmem:[%s1891] sm:$0xf]
    %v1893 = vld [vmem:[%s1891 + $0x4] sm:$0xf]
    %v1894 = vld [vmem:[%s1891 + $0x8] sm:$0xf]
    %v1895 = vld [vmem:[%s1891 + $0xc] sm:$0xf]
    %v1896 = vld [vmem:[%s1891 + $0x10] sm:$0xf]
    %v1897 = vld [vmem:[%s1891 + $0x14] sm:$0xf]
    %v1898 = vld [vmem:[%s1891 + $0x18] sm:$0xf]
    %v1899 = vld [vmem:[%s1891 + $0x1c] sm:$0xf]
    %v1900 = vld [vmem:[%s1891 + $0x20] sm:$0xf]
    %v1901 = vld [vmem:[%s1891 + $0x24] sm:$0xf]
    %v1902 = vld [vmem:[%s1891 + $0x28] sm:$0xf]
    %v1903 = vld [vmem:[%s1891 + $0x2c] sm:$0xf]
    %v1904 = vld [vmem:[%s1891 + $0x30] sm:$0xf]
    %v1905 = vld [vmem:[%s1891 + $0x34] sm:$0xf]
    %v1906 = vld [vmem:[%s1891 + $0x38] sm:$0xf]
    %v1907 = vld [vmem:[%s1891 + $0x3c] sm:$0xf]
    %v1908 = vlaneseq
    %v1909 = vshrl.u32 %v1908, 7
    %v1910 = vsub.s32 1, %v1909
    %v1911 = vrot.slane %v1692, %v1910
    %v1928 = vunpack.c.l.b16 %v1892
    %v1929 = vunpack.c.l.b16 %v1893
    %v1930 = vunpack.c.l.b16 %v1894
    %v1931 = vunpack.c.l.b16 %v1895
    %v1932 = vunpack.c.l.b16 %v1896
    %v1933 = vunpack.c.l.b16 %v1897
    %v1934 = vunpack.c.l.b16 %v1898
    %v1935 = vunpack.c.l.b16 %v1899
    %v1936 = vunpack.c.l.b16 %v1900
    %v1937 = vunpack.c.l.b16 %v1901
    %v1938 = vunpack.c.l.b16 %v1902
    %v1939 = vunpack.c.l.b16 %v1903
    %v1940 = vunpack.c.l.b16 %v1904
    %v1941 = vunpack.c.l.b16 %v1905
    %v1942 = vunpack.c.l.b16 %v1906
    %v1943 = vunpack.c.l.b16 %v1907
    %v1944 = vpack.c.b16 %v1929, %v1928
    %v1945 = vpack.c.b16 %v1931, %v1930
    %v1946 = vpack.c.b16 %v1933, %v1932
    %v1947 = vpack.c.b16 %v1935, %v1934
    %v1948 = vpack.c.b16 %v1937, %v1936
    %v1949 = vpack.c.b16 %v1939, %v1938
    %v1950 = vpack.c.b16 %v1941, %v1940
    %v1951 = vpack.c.b16 %v1943, %v1942
    %1960 = vmatprep.subr.bf16.mxu0 0
    %1961 = vmatpush1.bf16.msra.mxu0 %v1951
    %1962 = vmatprep.subr.bf16.mxu0 0
    %1963 = vmatpush1.bf16.msra.mxu0 %v1950
    %1964 = vmatprep.subr.bf16.mxu0 0
    %1965 = vmatpush1.bf16.msra.mxu0 %v1949
    %1966 = vmatprep.subr.bf16.mxu0 0
    %1967 = vmatpush1.bf16.msra.mxu0 %v1948
    %1968 = vmatprep.subr.bf16.mxu0 0
    %1969 = vmatpush1.bf16.msra.mxu0 %v1947
    %1970 = vmatprep.subr.bf16.mxu0 0
    %1971 = vmatpush1.bf16.msra.mxu0 %v1946
    %1972 = vmatprep.subr.bf16.mxu0 0
    %1973 = vmatpush1.bf16.msra.mxu0 %v1945
    %1974 = vmatprep.subr.bf16.mxu0 0
    %1975 = vmatpush1.bf16.msra.mxu0 %v1944
    %1976 = vmatprep.subr.bf16.mxu0 0
    %1977 = vmatpush2.bf16.msra.mxu0 0
    %1978 = vmatprep.subr.bf16.mxu0 0
    %1979 = vmatpush2.bf16.msra.mxu0 0
    %1980 = vmatprep.subr.bf16.mxu0 0
    %1981 = vmatpush2.bf16.msra.mxu0 0
    %1982 = vmatprep.subr.bf16.mxu0 0
    %1983 = vmatpush2.bf16.msra.mxu0 0
    %1984 = vmatprep.subr.bf16.mxu0 0
    %1985 = vmatpush2.bf16.msra.mxu0 0
    %1986 = vmatprep.subr.bf16.mxu0 0
    %1987 = vmatpush2.bf16.msra.mxu0 0
    %1988 = vmatprep.subr.bf16.mxu0 0
    %1989 = vmatpush2.bf16.msra.mxu0 0
    %1990 = vmatprep.subr.bf16.mxu0 0
    %1991 = vmatpush2.bf16.msra.mxu0 0
    %1992 = vmatprep.mubr.bf16.mxu0 0
    %1993 = vmatmul.mubr.bf16.gmra.mxu0 %v1883
    %v1994 = vpop.f32.mrf.mxu0
    %v1995 = vadd.f32 %v1911, %v1994
    %v1996 = vpop.f32.mrf.mxu0
    %v1997 = vpop.f32.mrf.mxu0
    %v1998 = vadd.f32 %v1911, %v1997
    %v1999 = vpop.f32.mrf.mxu0
    %2000 = vmatprep.mubr.bf16.mxu0 0
    %2001 = vmatmul.mubr.bf16.gmra.mxu0 %v1884
    %v2002 = vpop.f32.mrf.mxu0
    %v2003 = vadd.f32 %v1911, %v2002
    %v2004 = vpop.f32.mrf.mxu0
    %v2005 = vpop.f32.mrf.mxu0
    %v2006 = vadd.f32 %v1911, %v2005
    %v2007 = vpop.f32.mrf.mxu0
    %2008 = vmatprep.mubr.bf16.mxu0 0
    %2009 = vmatmul.mubr.bf16.gmra.mxu0 %v1885
    %v2010 = vpop.f32.mrf.mxu0
    %v2011 = vadd.f32 %v1911, %v2010
    %v2012 = vpop.f32.mrf.mxu0
    %v2013 = vpop.f32.mrf.mxu0
    %v2014 = vadd.f32 %v1911, %v2013
    %v2015 = vpop.f32.mrf.mxu0
    %2016 = vmatprep.mubr.bf16.mxu0 0
    %2017 = vmatmul.mubr.bf16.gmra.mxu0 %v1886
    %v2018 = vpop.f32.mrf.mxu0
    %v2019 = vadd.f32 %v1911, %v2018
    %v2020 = vpop.f32.mrf.mxu0
    %v2021 = vpop.f32.mrf.mxu0
    %v2022 = vadd.f32 %v1911, %v2021
    %v2023 = vpop.f32.mrf.mxu0
    %2024 = vmatprep.mubr.bf16.mxu0 0
    %2025 = vmatmul.mubr.bf16.gmra.mxu0 %v1887
    %v2026 = vpop.f32.mrf.mxu0
    %v2027 = vadd.f32 %v1911, %v2026
    %v2028 = vpop.f32.mrf.mxu0
    %v2029 = vpop.f32.mrf.mxu0
    %v2030 = vadd.f32 %v1911, %v2029
    %v2031 = vpop.f32.mrf.mxu0
    %2032 = vmatprep.mubr.bf16.mxu0 0
    %2033 = vmatmul.mubr.bf16.gmra.mxu0 %v1888
    %v2034 = vpop.f32.mrf.mxu0
    %v2035 = vadd.f32 %v1911, %v2034
    %v2036 = vpop.f32.mrf.mxu0
    %v2037 = vpop.f32.mrf.mxu0
    %v2038 = vadd.f32 %v1911, %v2037
    %v2039 = vpop.f32.mrf.mxu0
    %2040 = vmatprep.mubr.bf16.mxu0 0
    %2041 = vmatmul.mubr.bf16.gmra.mxu0 %v1889
    %v2042 = vpop.f32.mrf.mxu0
    %v2043 = vadd.f32 %v1911, %v2042
    %v2044 = vpop.f32.mrf.mxu0
    %v2045 = vpop.f32.mrf.mxu0
    %v2046 = vadd.f32 %v1911, %v2045
    %v2047 = vpop.f32.mrf.mxu0
    %2048 = vmatprep.mubr.bf16.mxu0 0
    %2049 = vmatmul.mubr.bf16.gmra.mxu0 %v1890
    %v2050 = vpop.f32.mrf.mxu0
    %v2051 = vadd.f32 %v1911, %v2050
    %v2052 = vpop.f32.mrf.mxu0
    %v2053 = vpop.f32.mrf.mxu0
    %v2054 = vadd.f32 %v1911, %v2053
    %v2055 = vpop.f32.mrf.mxu0
    %2056 = vdwg.mxu0
    %v2057 = vmax.f32 %v1995, 0.0
    %v2058 = vmax.f32 %v1998, 0.0
    %v2059 = vmax.f32 %v2003, 0.0
    %v2060 = vmax.f32 %v2006, 0.0
    %v2061 = vmax.f32 %v2011, 0.0
    %v2062 = vmax.f32 %v2014, 0.0
    %v2063 = vmax.f32 %v2019, 0.0
    %v2064 = vmax.f32 %v2022, 0.0
    %v2065 = vmax.f32 %v2027, 0.0
    %v2066 = vmax.f32 %v2030, 0.0
    %v2067 = vmax.f32 %v2035, 0.0
    %v2068 = vmax.f32 %v2038, 0.0
    %v2069 = vmax.f32 %v2043, 0.0
    %v2070 = vmax.f32 %v2046, 0.0
    %v2071 = vmax.f32 %v2051, 0.0
    %v2072 = vmax.f32 %v2054, 0.0
    %v2073 = vlaneseq
    %v2074 = vshrl.u32 %v2073, 7
    %v2075 = vsub.s32 2, %v2074
    %v2076 = vrot.slane %v1692, %v2075
    %v2077 = vmul.f32 %v2057, %v2076
    %v2078 = vmul.f32 %v2058, %v2076
    %v2079 = vmul.f32 %v2059, %v2076
    %v2080 = vmul.f32 %v2060, %v2076
    %v2081 = vmul.f32 %v2061, %v2076
    %v2082 = vmul.f32 %v2062, %v2076
    %v2083 = vmul.f32 %v2063, %v2076
    %v2084 = vmul.f32 %v2064, %v2076
    %v2085 = vmul.f32 %v2065, %v2076
    %v2086 = vmul.f32 %v2066, %v2076
    %v2087 = vmul.f32 %v2067, %v2076
    %v2088 = vmul.f32 %v2068, %v2076
    %v2089 = vmul.f32 %v2069, %v2076
    %v2090 = vmul.f32 %v2070, %v2076
    %v2091 = vmul.f32 %v2071, %v2076
    %v2092 = vmul.f32 %v2072, %v2076
    %v2093 = vlaneseq
    %v2094 = vshrl.u32 %v2093, 7
    %v2095 = vsub.s32 3, %v2094
    %v2096 = vrot.slane %v1692, %v2095
    %v2097 = vadd.f32 %v2077, %v2096
    %v2098 = vadd.f32 %v2078, %v2096
    %v2099 = vadd.f32 %v2079, %v2096
    %v2100 = vadd.f32 %v2080, %v2096
    %v2101 = vadd.f32 %v2081, %v2096
    %v2102 = vadd.f32 %v2082, %v2096
    %v2103 = vadd.f32 %v2083, %v2096
    %v2104 = vadd.f32 %v2084, %v2096
    %v2105 = vadd.f32 %v2085, %v2096
    %v2106 = vadd.f32 %v2086, %v2096
    %v2107 = vadd.f32 %v2087, %v2096
    %v2108 = vadd.f32 %v2088, %v2096
    %v2109 = vadd.f32 %v2089, %v2096
    %v2110 = vadd.f32 %v2090, %v2096
    %v2111 = vadd.f32 %v2091, %v2096
    %v2112 = vadd.f32 %v2092, %v2096
    %v2113 = vpack.c.bf16 %v2098, %v2097
    %v2114 = vpack.c.bf16 %v2100, %v2099
    %v2115 = vpack.c.bf16 %v2102, %v2101
    %v2116 = vpack.c.bf16 %v2104, %v2103
    %v2117 = vpack.c.bf16 %v2106, %v2105
    %v2118 = vpack.c.bf16 %v2108, %v2107
    %v2119 = vpack.c.bf16 %v2110, %v2109
    %v2120 = vpack.c.bf16 %v2112, %v2111
    %2121 = vmatprep.subr.bf16.mxu0 0
    %2122 = vmatpush1.bf16.msra.mxu0 %v2120
    %2123 = vmatprep.subr.bf16.mxu0 0
    %2124 = vmatpush1.bf16.msra.mxu0 %v2119
    %2125 = vmatprep.subr.bf16.mxu0 0
    %2126 = vmatpush1.bf16.msra.mxu0 %v2118
    %2127 = vmatprep.subr.bf16.mxu0 0
    %2128 = vmatpush1.bf16.msra.mxu0 %v2117
    %2129 = vmatprep.subr.bf16.mxu0 0
    %2130 = vmatpush1.bf16.msra.mxu0 %v2116
    %2131 = vmatprep.subr.bf16.mxu0 0
    %2132 = vmatpush1.bf16.msra.mxu0 %v2115
    %2133 = vmatprep.subr.bf16.mxu0 0
    %2134 = vmatpush1.bf16.msra.mxu0 %v2114
    %2135 = vmatprep.subr.bf16.mxu0 0
    %2136 = vmatpush1.bf16.msra.mxu0 %v2113
    %2137 = vmatprep.subr.bf16.mxu0 0
    %2138 = vmatpush2.bf16.msra.mxu0 0
    %2139 = vmatprep.subr.bf16.mxu0 0
    %2140 = vmatpush2.bf16.msra.mxu0 0
    %2141 = vmatprep.subr.bf16.mxu0 0
    %2142 = vmatpush2.bf16.msra.mxu0 0
    %2143 = vmatprep.subr.bf16.mxu0 0
    %2144 = vmatpush2.bf16.msra.mxu0 0
    %2145 = vmatprep.subr.bf16.mxu0 0
    %2146 = vmatpush2.bf16.msra.mxu0 0
    %2147 = vmatprep.subr.bf16.mxu0 0
    %2148 = vmatpush2.bf16.msra.mxu0 0
    %2149 = vmatprep.subr.bf16.mxu0 0
    %2150 = vmatpush2.bf16.msra.mxu0 0
    %2151 = vmatprep.subr.bf16.mxu0 0
    %2152 = vmatpush2.bf16.msra.mxu0 0
    %2153 = vmatprep.mubr.bf16.mxu0 0
    %2154 = vmatmul.mubr.bf16.gmra.mxu0 %v775
    %v2155 = vpop.f32.mrf.mxu0
    %v2156 = vadd.f32 0.0, %v2155
    %v2157 = vpop.f32.mrf.mxu0
    %v2158 = vpop.f32.mrf.mxu0
    %v2159 = vpop.f32.mrf.mxu0
    %2160 = vdwg.mxu0
    %v2161 = vpack.c.bf16 %v2156, %v2156
    %s2162 = scalar_lea.vmem [#allocation11], 128
    %v2163 = vld [vmem:[%s2162] sm:$0xf]
    %v2164 = vld [vmem:[%s2162 + $0x4] sm:$0xf]
    %v2165 = vld [vmem:[%s2162 + $0x8] sm:$0xf]
    %v2166 = vld [vmem:[%s2162 + $0xc] sm:$0xf]
    %v2167 = vld [vmem:[%s2162 + $0x10] sm:$0xf]
    %v2168 = vld [vmem:[%s2162 + $0x14] sm:$0xf]
    %v2169 = vld [vmem:[%s2162 + $0x18] sm:$0xf]
    %v2170 = vld [vmem:[%s2162 + $0x1c] sm:$0xf]
    %v2171 = vld [vmem:[%s2162 + $0x20] sm:$0xf]
    %v2172 = vld [vmem:[%s2162 + $0x24] sm:$0xf]
    %v2173 = vld [vmem:[%s2162 + $0x28] sm:$0xf]
    %v2174 = vld [vmem:[%s2162 + $0x2c] sm:$0xf]
    %v2175 = vld [vmem:[%s2162 + $0x30] sm:$0xf]
    %v2176 = vld [vmem:[%s2162 + $0x34] sm:$0xf]
    %v2177 = vld [vmem:[%s2162 + $0x38] sm:$0xf]
    %v2178 = vld [vmem:[%s2162 + $0x3c] sm:$0xf]
    %v2195 = vunpack.c.l.b16 %v2163
    %v2196 = vunpack.c.l.b16 %v2164
    %v2197 = vunpack.c.l.b16 %v2165
    %v2198 = vunpack.c.l.b16 %v2166
    %v2199 = vunpack.c.l.b16 %v2167
    %v2200 = vunpack.c.l.b16 %v2168
    %v2201 = vunpack.c.l.b16 %v2169
    %v2202 = vunpack.c.l.b16 %v2170
    %v2203 = vunpack.c.l.b16 %v2171
    %v2204 = vunpack.c.l.b16 %v2172
    %v2205 = vunpack.c.l.b16 %v2173
    %v2206 = vunpack.c.l.b16 %v2174
    %v2207 = vunpack.c.l.b16 %v2175
    %v2208 = vunpack.c.l.b16 %v2176
    %v2209 = vunpack.c.l.b16 %v2177
    %v2210 = vunpack.c.l.b16 %v2178
    %v2211 = vpack.c.b16 %v2196, %v2195
    %v2212 = vpack.c.b16 %v2198, %v2197
    %v2213 = vpack.c.b16 %v2200, %v2199
    %v2214 = vpack.c.b16 %v2202, %v2201
    %v2215 = vpack.c.b16 %v2204, %v2203
    %v2216 = vpack.c.b16 %v2206, %v2205
    %v2217 = vpack.c.b16 %v2208, %v2207
    %v2218 = vpack.c.b16 %v2210, %v2209
    %2227 = vmatprep.subr.bf16.mxu0 0
    %2228 = vmatpush1.bf16.msra.mxu0 %v2218
    %2229 = vmatprep.subr.bf16.mxu0 0
    %2230 = vmatpush1.bf16.msra.mxu0 %v2217
    %2231 = vmatprep.subr.bf16.mxu0 0
    %2232 = vmatpush1.bf16.msra.mxu0 %v2216
    %2233 = vmatprep.subr.bf16.mxu0 0
    %2234 = vmatpush1.bf16.msra.mxu0 %v2215
    %2235 = vmatprep.subr.bf16.mxu0 0
    %2236 = vmatpush1.bf16.msra.mxu0 %v2214
    %2237 = vmatprep.subr.bf16.mxu0 0
    %2238 = vmatpush1.bf16.msra.mxu0 %v2213
    %2239 = vmatprep.subr.bf16.mxu0 0
    %2240 = vmatpush1.bf16.msra.mxu0 %v2212
    %2241 = vmatprep.subr.bf16.mxu0 0
    %2242 = vmatpush1.bf16.msra.mxu0 %v2211
    %2243 = vmatprep.subr.bf16.mxu0 0
    %2244 = vmatpush2.bf16.msra.mxu0 0
    %2245 = vmatprep.subr.bf16.mxu0 0
    %2246 = vmatpush2.bf16.msra.mxu0 0
    %2247 = vmatprep.subr.bf16.mxu0 0
    %2248 = vmatpush2.bf16.msra.mxu0 0
    %2249 = vmatprep.subr.bf16.mxu0 0
    %2250 = vmatpush2.bf16.msra.mxu0 0
    %2251 = vmatprep.subr.bf16.mxu0 0
    %2252 = vmatpush2.bf16.msra.mxu0 0
    %2253 = vmatprep.subr.bf16.mxu0 0
    %2254 = vmatpush2.bf16.msra.mxu0 0
    %2255 = vmatprep.subr.bf16.mxu0 0
    %2256 = vmatpush2.bf16.msra.mxu0 0
    %2257 = vmatprep.subr.bf16.mxu0 0
    %2258 = vmatpush2.bf16.msra.mxu0 0
    %2259 = vmatprep.mubr.bf16.mxu0 0
    %2260 = vmatmul.mubr.bf16.gmra.mxu0 %v2161
    %v2261 = vpop.f32.mrf.mxu0
    %v2262 = vadd.f32 0.0, %v2261
    %v2263 = vpop.f32.mrf.mxu0
    %v2264 = vpop.f32.mrf.mxu0
    %v2265 = vpop.f32.mrf.mxu0
    %2266 = vdwg.mxu0
    %v2267 = vadd.f32 %v1589, %v2262
    %v2268 = vld [vmem:[%s7] sm:$0xff]
    %2270 = vset.pattern.permute.xlu0 0
    %2271 = vperm.xlu0 %2270, %v2268
    %v2272 = vpop.permute.xlu0 %2271
    %v2274 = vmul.f32 %v2272, %v2267
    %v2275 = vld [vmem:[%s8] sm:$0x1]
    %v2277 = vlaneseq
    %v2278 = vshrl.u32 %v2277, 7
    %v2279 = vsub.s32 0, %v2278
    %v2280 = vrot.slane %v2275, %v2279
    %v2282 = vadd.f32 %v2274, %v2280
    %v2283 = vmax.f32 %v2282, 0.0
    %v2284 = vld [vmem:[%s9] sm:$0x1]
    %v2286 = vlaneseq
    %v2287 = vshrl.u32 %v2286, 7
    %v2288 = vsub.s32 0, %v2287
    %v2289 = vrot.slane %v2284, %v2288
    %v2291 = vmul.f32 %v2283, %v2289
    %2292 = vadd.xlane.f32.xlu0 %v2291
    %v2293 = vpop.xlane.xlu0 %2292
    %v2294 = vld [vmem:[#allocation2] sm:$0x1]
    %v2296 = vlaneseq
    %v2297 = vshrl.u32 %v2296, 7
    %v2298 = vsub.s32 0, %v2297
    %v2299 = vrot.slane %v2294, %v2298
    %v2301 = vadd.f32 %v2293, %v2299
    %vm2302 = vcmask 7168
    %2303 = vst.msk [vmem:[%s11] sm:$0xff] %vm2302, %v2301
    // Predicated region
    $region70: #{tpu_custom_call.1} parent=1 // pred_check
      _
    $region71: #{tpu_custom_call.1} parent=1 // pred_check_branch
      %2305 = sbr.rel (0) target = $region73
    $region72: #{tpu_custom_call.1} parent=1 // pred_region
      _
    $region73: #{tpu_custom_call.1} parent=1 // pred_fallthru
      _
    // Predicated region
    $region74: #{tpu_custom_call.1} parent=1 // pred_check
      _
    $region75: #{tpu_custom_call.1} parent=1 // pred_check_branch
      %2307 = sbr.rel (0) target = $region77
    $region76: #{tpu_custom_call.1} parent=1 // pred_region
      _
    $region77: #{tpu_custom_call.1} parent=1 // pred_fallthru
      _
    %2308 = vsyncpa [#allocation4], 1
    %2309 = vsyncpa [#allocation6], 1
    %2310 = vsyncpa [#allocation9], 1
    %2311 = vsyncpa [#allocation12], 1

</llo_original>
